<compile_context>
chip_gen: v5e
topology: v5e:2x2
jax: 0.10.0
libtpu: 0.0.40
codegen_flags: <defaults>
</compile_context>

<pallas_src>
import functools
import math

import numpy as np
import jax
import jax.numpy as jnp
from jax import lax
from jax.experimental import pallas as pl
from jax.experimental.pallas import tpu as pltpu

_NEG = float(np.finfo(np.float32).min) / 2.0  # large-negative additive mask


def _full_attn_kernel(q_ref, k_ref, v_ref, bias_ref, o_ref, *, scale):
    f32 = jnp.float32
    q = q_ref[...].astype(f32) * f32(scale)   # (G, L, E), scale folded into Q
    k = k_ref[...].astype(f32)                # (G, S, E)
    v = v_ref[...].astype(f32)                # (G, S, D)
    bias = bias_ref[...]                      # (L, S) additive mask, resident

    # scores = scale * Q @ K^T  + causal bias          (MXU, f32 accumulation)
    s = jnp.einsum('gle,gse->gls', q, k, preferred_element_type=f32)
    s = s + bias[None, :, :]

    # row-wise softmax
    m = jnp.max(s, axis=-1, keepdims=True)
    p = jnp.exp(s - m)
    attn = p / jnp.sum(p, axis=-1, keepdims=True)

    # context = attn @ V                                (MXU, f32 accumulation)
    o = jnp.einsum('gls,gsd->gld', attn, v, preferred_element_type=f32)
    o_ref[...] = o.astype(o_ref.dtype)


def _pick_group(bh, per_head_bytes, budget_bytes=8 * 1024 * 1024):
    """Largest divisor G of B*H that fits the VMEM budget and leaves >=2 steps."""
    g_cap = max(1, budget_bytes // max(per_head_bytes, 1))
    best = 1
    for g in range(1, bh + 1):
        if bh % g != 0 or g > g_cap:
            continue
        if bh >= 2 and (bh // g) < 2:
            continue  # keep >= 2 grid steps so both v7x TensorCores get work
        best = max(best, g)
    return best


def full_attention(queries, keys, values, attn_mask=None, *,
                   mask_flag=True, scale=None, output_attention=False):
    """Pallas implementation of FullAttention.forward (output_attention=False)."""
    B, L, H, E = queries.shape
    _, S, _, D = values.shape
    scale_val = float(scale) if scale is not None else 1.0 / math.sqrt(E)

    q = jnp.transpose(queries, (0, 2, 1, 3)).reshape(B * H, L, E).astype(jnp.float32)
    k = jnp.transpose(keys, (0, 2, 1, 3)).reshape(B * H, S, E).astype(jnp.float32)
    v = jnp.transpose(values, (0, 2, 1, 3)).reshape(B * H, S, D).astype(jnp.float32)

    # Grid-invariant additive mask bias (0 where allowed, -huge where masked).
    if mask_flag:
        if attn_mask is None:
            # TriangularCausalMask: mask key positions strictly after the query.
            masked = jnp.arange(S)[None, :] > jnp.arange(L)[:, None]
        else:
            # TODO(synk): per-batch (B,1,L,L) attn_mask tensors not supported;
            # only a shared (L, S) boolean mask (True = masked) is accepted.
            masked = jnp.asarray(attn_mask, bool).reshape(L, S)
        bias = jnp.where(masked, jnp.float32(_NEG), jnp.float32(0.0))
    else:
        bias = jnp.zeros((L, S), jnp.float32)

    BH = B * H
    per_head_bytes = 4 * (L * E + S * E + S * D + L * D + 2 * L * S)
    G = _pick_group(BH, per_head_bytes)

    kernel = functools.partial(_full_attn_kernel, scale=scale_val)
    out = pl.pallas_call(
        kernel,
        out_shape=jax.ShapeDtypeStruct((BH, L, D), jnp.float32),
        grid=(BH // G,),
        in_specs=[
            pl.BlockSpec((G, L, E), lambda i: (i, 0, 0)),
            pl.BlockSpec((G, S, E), lambda i: (i, 0, 0)),
            pl.BlockSpec((G, S, D), lambda i: (i, 0, 0)),
            pl.BlockSpec((L, S), lambda i: (0, 0)),       # resident across grid
        ],
        out_specs=pl.BlockSpec((G, L, D), lambda i: (i, 0, 0)),
        compiler_params=pltpu.CompilerParams(
            dimension_semantics=("parallel",)),
    )(q, k, v, bias)

    context = out.reshape(B, H, L, D).transpose(0, 2, 1, 3).astype(values.dtype)
    # TODO(synk): output_attention=True path (returning the (B,H,L,S) attention
    # map) not implemented; the module default is False, so attn is None.
    # TODO(synk): nn.Dropout(attention_dropout) is skipped (eval/inference
    # semantics -> identity).
    return context, None


def full_attention_ref(queries, keys, values, attn_mask=None, *,
                       mask_flag=True, scale=None):
    """Pure-JAX mirror of the PyTorch forward, for verification."""
    B, L, H, E = queries.shape
    _, S, _, D = values.shape
    scale_val = scale if scale is not None else 1.0 / math.sqrt(E)
    scores = jnp.einsum('blhe,bshe->bhls', queries, keys,
                        precision=lax.Precision.HIGHEST)
    if mask_flag:
        if attn_mask is None:
            masked = jnp.arange(S)[None, :] > jnp.arange(L)[:, None]
        else:
            masked = jnp.asarray(attn_mask, bool).reshape(L, S)
        scores = jnp.where(masked[None, None], -jnp.inf, scores)
    A = jax.nn.softmax(scale_val * scores, axis=-1)
    V = jnp.einsum('bhls,bshd->blhd', A, values,
                   precision=lax.Precision.HIGHEST)
    return V, None


if __name__ == "__main__":
    B, L, H, E = 2, 64, 4, 32
    S, D = L, E
    key = jax.random.PRNGKey(0)
    kq, kk, kv = jax.random.split(key, 3)
    queries = jax.random.normal(kq, (B, L, H, E), jnp.float32)
    keys_ = jax.random.normal(kk, (B, S, H, E), jnp.float32)
    values = jax.random.normal(kv, (B, S, H, D), jnp.float32)

    ctx, attn = full_attention(queries, keys_, values, None, mask_flag=True)
    ctx = jax.block_until_ready(ctx)
    assert attn is None
    assert ctx.shape == (B, L, H, D)

    ref, _ = full_attention_ref(queries, keys_, values, None, mask_flag=True)
    np.testing.assert_allclose(np.asarray(ctx), np.asarray(ref),
                               rtol=2e-2, atol=2e-2)
    print("KERNEL_OK")
</pallas_src>

<mosaic_0001>
module attributes {stable_mosaic.version = 11 : i64} {
  func.func @_full_attn_kernel(%arg0: i32, %arg1: memref<4x64x32xf32, #tpu.memory_space<vmem>>, %arg2: memref<4x64x32xf32, #tpu.memory_space<vmem>>, %arg3: memref<4x64x32xf32, #tpu.memory_space<vmem>>, %arg4: memref<64x64xf32, #tpu.memory_space<vmem>>, %arg5: memref<4x64x32xf32, #tpu.memory_space<vmem>>) attributes {dimension_semantics = [#tpu.dimension_semantics<parallel>], iteration_bounds = array<i64: 2>, scalar_prefetch = 0 : i64, scratch_operands = 0 : i64, tpu.core_type = #tpu.core_type<tc>, window_params = [{transform_indices = @transform_0, window_bounds = array<i64: 4, 64, 32>}, {transform_indices = @transform_1, window_bounds = array<i64: 4, 64, 32>}, {transform_indices = @transform_2, window_bounds = array<i64: 4, 64, 32>}, {pipeline_mode = #tpu.pipeline_mode<synchronous>, transform_indices = @transform_3, window_bounds = array<i64: 64, 64>}, {transform_indices = @transform_4, window_bounds = array<i64: 4, 64, 32>}]} {
    %c0 = arith.constant 0 : index
    %c0_0 = arith.constant 0 : index
    %c0_1 = arith.constant 0 : index
    %0 = vector.load %arg1[%c0, %c0_0, %c0_1] : memref<4x64x32xf32, #tpu.memory_space<vmem>>, vector<4x64x32xf32>
    %cst = arith.constant 0.176776692 : f32
    %1 = vector.broadcast %cst : f32 to vector<4x64x32xf32>
    %2 = arith.mulf %0, %1 : vector<4x64x32xf32>
    %c0_2 = arith.constant 0 : index
    %c0_3 = arith.constant 0 : index
    %c0_4 = arith.constant 0 : index
    %3 = vector.load %arg2[%c0_2, %c0_3, %c0_4] : memref<4x64x32xf32, #tpu.memory_space<vmem>>, vector<4x64x32xf32>
    %c0_5 = arith.constant 0 : index
    %c0_6 = arith.constant 0 : index
    %c0_7 = arith.constant 0 : index
    %4 = vector.load %arg3[%c0_5, %c0_6, %c0_7] : memref<4x64x32xf32, #tpu.memory_space<vmem>>, vector<4x64x32xf32>
    %c0_8 = arith.constant 0 : index
    %c0_9 = arith.constant 0 : index
    %5 = vector.load %arg4[%c0_8, %c0_9] : memref<64x64xf32, #tpu.memory_space<vmem>>, vector<64x64xf32>
    "tpu.trace_start"() <{level = 10 : i32, message = "gle,gse->gls"}> : () -> ()
    %cst_10 = arith.constant dense<0.000000e+00> : vector<4x64x64xf32>
    %6 = tpu.matmul %2, %3, %cst_10 {dimension_numbers = #tpu.dot_dimension_numbers<[2], [2], [1], [1], [0, 0, 0, 1, 1, 1], [0], [0]>} : vector<4x64x32xf32>, vector<4x64x32xf32>, vector<4x64x64xf32> -> vector<4x64x64xf32>
    "tpu.trace_stop"() : () -> ()
    %7 = vector.shape_cast %5 : vector<64x64xf32> to vector<1x64x64xf32>
    %8 = vector.broadcast %7 : vector<1x64x64xf32> to vector<4x64x64xf32>
    %9 = arith.addf %6, %8 : vector<4x64x64xf32>
    %cst_11 = arith.constant dense<0xFF800000> : vector<4x64xf32>
    %10 = vector.multi_reduction <maximumf>, %9, %cst_11 [2] : vector<4x64x64xf32> to vector<4x64xf32>
    %11 = vector.shape_cast %10 : vector<4x64xf32> to vector<4x64x1xf32>
    %12 = vector.broadcast %11 : vector<4x64x1xf32> to vector<4x64x64xf32>
    %13 = arith.subf %9, %12 : vector<4x64x64xf32>
    %14 = math.exp %13 : vector<4x64x64xf32>
    %cst_12 = arith.constant dense<0.000000e+00> : vector<4x64xf32>
    %15 = vector.multi_reduction <add>, %14, %cst_12 [2] : vector<4x64x64xf32> to vector<4x64xf32>
    %16 = vector.shape_cast %15 : vector<4x64xf32> to vector<4x64x1xf32>
    %17 = vector.broadcast %16 : vector<4x64x1xf32> to vector<4x64x64xf32>
    %18 = arith.divf %14, %17 : vector<4x64x64xf32>
    "tpu.trace_start"() <{level = 10 : i32, message = "gls,gsd->gld"}> : () -> ()
    %cst_13 = arith.constant dense<0.000000e+00> : vector<4x64x32xf32>
    %19 = tpu.matmul %18, %4, %cst_13 {dimension_numbers = #tpu.dot_dimension_numbers<[2], [1], [1], [2], [0, 0, 0, 1, 1, 2], [0], [0]>} : vector<4x64x64xf32>, vector<4x64x32xf32>, vector<4x64x32xf32> -> vector<4x64x32xf32>
    "tpu.trace_stop"() : () -> ()
    %c0_14 = arith.constant 0 : index
    %c0_15 = arith.constant 0 : index
    %c0_16 = arith.constant 0 : index
    %20 = vector.load %arg5[%c0_14, %c0_15, %c0_16] : memref<4x64x32xf32, #tpu.memory_space<vmem>>, vector<4x64x32xf32>
    tpu.vector_store %arg5[%c0_14, %c0_15, %c0_16], %19 {strides = array<i32>} : memref<4x64x32xf32, #tpu.memory_space<vmem>>, vector<4x64x32xf32>,
    return
  }
  func.func @transform_0(%arg0: i32) -> (i32, i32, i32) {
    %c0_i32 = arith.constant 0 : i32
    %c0_i32_0 = arith.constant 0 : i32
    %c0_i32_1 = arith.constant 0 : i32
    return %arg0, %c0_i32, %c0_i32_0 : i32, i32, i32
  }
  func.func @transform_1(%arg0: i32) -> (i32, i32, i32) {
    %c0_i32 = arith.constant 0 : i32
    %c0_i32_0 = arith.constant 0 : i32
    %c0_i32_1 = arith.constant 0 : i32
    return %arg0, %c0_i32, %c0_i32_0 : i32, i32, i32
  }
  func.func @transform_2(%arg0: i32) -> (i32, i32, i32) {
    %c0_i32 = arith.constant 0 : i32
    %c0_i32_0 = arith.constant 0 : i32
    %c0_i32_1 = arith.constant 0 : i32
    return %arg0, %c0_i32, %c0_i32_0 : i32, i32, i32
  }
  func.func @transform_3(%arg0: i32) -> (i32, i32) {
    %c0_i32 = arith.constant 0 : i32
    %c0_i32_0 = arith.constant 0 : i32
    %c0_i32_1 = arith.constant 0 : i32
    return %c0_i32, %c0_i32_0 : i32, i32
  }
  func.func @transform_4(%arg0: i32) -> (i32, i32, i32) {
    %c0_i32 = arith.constant 0 : i32
    %c0_i32_0 = arith.constant 0 : i32
    %c0_i32_1 = arith.constant 0 : i32
    return %arg0, %c0_i32, %c0_i32_0 : i32, i32, i32
  }
}

</mosaic_0001>

<llo_original>
// kernel: tpu_custom_call.1
$region0: #{tpu_custom_call.1}
  #allocation0 [shape = 'u32[]', space=smem, size = 0x4, offset = 0x4, fixed_abs, tag = 'smem constant byte address 0x4 - core index']
  #allocation1 [shape = 'u32[72,128]{1,0:T(1,128)}', space=vmem, size = 0x9000, scoped, tag = 'internal scratch']
  %s0 = inlined_call_operand.vmem [shape: f32[8,64,32], index: 0, kind: input, shape index: {}]
  %s1 = inlined_call_operand.vmem [shape: f32[8,64,32], index: 1, kind: input, shape index: {}]
  %s2 = inlined_call_operand.vmem [shape: f32[8,64,32], index: 2, kind: input, shape index: {}]
  %s3 = inlined_call_operand.vmem [shape: f32[64,64], index: 3, kind: input, shape index: {}]
  %s4 = inlined_call_operand.vmem [shape: f32[8,64,32], index: 4, kind: output, shape index: {}]
  %s5 = sld [smem:[#allocation0]]
  $region49: #{tpu_custom_call.1} parent=0
    _
  %s7 = ssub.s32 1, %s5
  %s8 = scalar_select 0, %s7, %s5
  loop: start=0, step=1, limit=4
  $region2: #{tpu_custom_call.1} parent=0 // loop_pre_header
    _
  $region3: #{tpu_custom_call.1} parent=0 // loop_header
    %s10 = sphi 0, %s14
    %p11 = scmp.ge.s32.totalorder %s10, 4
    %s20 = sphi 0, %s22
    %s23 = sphi 0, %s20
    %s24 = sphi 0, %s23
    %s40 = sphi 0, %s24
    %s46 = sphi 0, %s48
    %s49 = sphi 0, %s46
    %s50 = sphi 0, %s49
    %s66 = sphi 0, %s50
    %s72 = sphi 0, %s74
    %s75 = sphi 0, %s72
    %s76 = sphi 0, %s75
    %s92 = sphi 0, %s76
    %s96 = sphi 0, %s96
    %s98 = sphi 0, %s96
    %s99 = sphi 0, %s98
    %s113 = sphi 0, %s99
    %s119 = sphi 0, %s121
    %s122 = sphi 0, %s119
    %s123 = sphi 0, %s122
    %s139 = sphi 0, %s123
  $region4: #{tpu_custom_call.1} parent=0 // loop_header_branch
    %13 = sbr.rel (%p11) target = $region8
  $region5: #{tpu_custom_call.1} parent=0 // loop_body
    %s15 = ssub.s32 %s10, 1
    %s16 = ssub.s32 %s10, 2
    %s17 = sadd.s32 %s10, 1
    %s18 = ssub.s32 %s10, %s17
    %p19 = scmp.eq.s32.totalorder %s18, 0
    %s21 = sadd.s32 %s20, 1
    %s22 = scalar_select %p19, %s20, %s21
    %p25 = pneg %p19
    %p26 = scmp.eq.s32.totalorder %s10, 1
    %p27 = por %p25, %p26
    %p28 = scmp.ne.s32.totalorder %s20, %s23
    %p29 = scmp.eq.s32.totalorder %s10, 0
    %p30 = por %p28, %p29
    %p31 = scmp.ne.s32.totalorder %s20, %s23
    %p32 = scmp.eq.s32.totalorder %s15, 1
    %p33 = por %p31, %p32
    %p34 = scmp.ne.s32.totalorder %s23, %s24
    %p35 = scmp.eq.s32.totalorder %s15, 0
    %p36 = por %p34, %p35
    %p37 = scmp.ne.s32.totalorder %s23, %s24
    %p38 = scmp.eq.s32.totalorder %s16, 1
    %p39 = por %p37, %p38
    %p41 = scmp.ne.s32.totalorder %s24, %s40
    %p42 = scmp.eq.s32.totalorder %s16, 0
    %p43 = por %p41, %p42
    %s44 = ssub.s32 %s10, %s17
    %p45 = scmp.eq.s32.totalorder %s44, 0
    %s47 = sadd.s32 %s46, 1
    %s48 = scalar_select %p45, %s46, %s47
    %p51 = pneg %p45
    %p52 = scmp.eq.s32.totalorder %s10, 1
    %p53 = por %p51, %p52
    %p54 = scmp.ne.s32.totalorder %s46, %s49
    %p55 = scmp.eq.s32.totalorder %s10, 0
    %p56 = por %p54, %p55
    %p57 = scmp.ne.s32.totalorder %s46, %s49
    %p58 = scmp.eq.s32.totalorder %s15, 1
    %p59 = por %p57, %p58
    %p60 = scmp.ne.s32.totalorder %s49, %s50
    %p61 = scmp.eq.s32.totalorder %s15, 0
    %p62 = por %p60, %p61
    %p63 = scmp.ne.s32.totalorder %s49, %s50
    %p64 = scmp.eq.s32.totalorder %s16, 1
    %p65 = por %p63, %p64
    %p67 = scmp.ne.s32.totalorder %s50, %s66
    %p68 = scmp.eq.s32.totalorder %s16, 0
    %p69 = por %p67, %p68
    %s70 = ssub.s32 %s10, %s17
    %p71 = scmp.eq.s32.totalorder %s70, 0
    %s73 = sadd.s32 %s72, 1
    %s74 = scalar_select %p71, %s72, %s73
    %p77 = pneg %p71
    %p78 = scmp.eq.s32.totalorder %s10, 1
    %p79 = por %p77, %p78
    %p80 = scmp.ne.s32.totalorder %s72, %s75
    %p81 = scmp.eq.s32.totalorder %s10, 0
    %p82 = por %p80, %p81
    %p83 = scmp.ne.s32.totalorder %s72, %s75
    %p84 = scmp.eq.s32.totalorder %s15, 1
    %p85 = por %p83, %p84
    %p86 = scmp.ne.s32.totalorder %s75, %s76
    %p87 = scmp.eq.s32.totalorder %s15, 0
    %p88 = por %p86, %p87
    %p89 = scmp.ne.s32.totalorder %s75, %s76
    %p90 = scmp.eq.s32.totalorder %s16, 1
    %p91 = por %p89, %p90
    %p93 = scmp.ne.s32.totalorder %s76, %s92
    %p94 = scmp.eq.s32.totalorder %s16, 0
    %p95 = por %p93, %p94
    %s97 = sadd.s32 %s96, 1
    %p100 = scmp.eq.s32.totalorder %s10, 1
    %p101 = scmp.ne.s32.totalorder %s96, %s98
    %p102 = scmp.eq.s32.totalorder %s10, 0
    %p103 = por %p101, %p102
    %p104 = scmp.ne.s32.totalorder %s96, %s98
    %p105 = scmp.eq.s32.totalorder %s15, 1
    %p106 = por %p104, %p105
    %p107 = scmp.ne.s32.totalorder %s98, %s99
    %p108 = scmp.eq.s32.totalorder %s15, 0
    %p109 = por %p107, %p108
    %p110 = scmp.ne.s32.totalorder %s98, %s99
    %p111 = scmp.eq.s32.totalorder %s16, 1
    %p112 = por %p110, %p111
    %p114 = scmp.ne.s32.totalorder %s99, %s113
    %p115 = scmp.eq.s32.totalorder %s16, 0
    %p116 = por %p114, %p115
    %s117 = ssub.s32 %s10, %s17
    %p118 = scmp.eq.s32.totalorder %s117, 0
    %s120 = sadd.s32 %s119, 1
    %s121 = scalar_select %p118, %s119, %s120
    %p124 = pneg %p118
    %p125 = scmp.eq.s32.totalorder %s10, 1
    %p126 = por %p124, %p125
    %p127 = scmp.ne.s32.totalorder %s119, %s122
    %p128 = scmp.eq.s32.totalorder %s10, 0
    %p129 = por %p127, %p128
    %p130 = scmp.ne.s32.totalorder %s119, %s122
    %p131 = scmp.eq.s32.totalorder %s15, 1
    %p132 = por %p130, %p131
    %p133 = scmp.ne.s32.totalorder %s122, %s123
    %p134 = scmp.eq.s32.totalorder %s15, 0
    %p135 = por %p133, %p134
    %p136 = scmp.ne.s32.totalorder %s122, %s123
    %p137 = scmp.eq.s32.totalorder %s16, 1
    %p138 = por %p136, %p137
    %p140 = scmp.ne.s32.totalorder %s123, %s139
    %p141 = scmp.eq.s32.totalorder %s16, 0
    %p142 = por %p140, %p141
    %p143 = scmp.le.s32.totalorder 1, %s10
    %p144 = scmp.lt.s32.totalorder %s10, 3
    %p145 = pnand %p143, %p144
    %p146 = pneg %p145
    // Predicated region
    $region9: #{tpu_custom_call.1} parent=5 // pred_check
      _
    $region10: #{tpu_custom_call.1} parent=5 // pred_check_branch
      %148 = sbr.rel (%p145) target = $region12
    $region11: #{tpu_custom_call.1} parent=5 // pred_region
      %s149 = ssub.s32 %s10, 1
      // Predicated region
      $region13: #{tpu_custom_call.1} parent=11 // pred_check
        %p150 = pneg %p109
      $region14: #{tpu_custom_call.1} parent=11 // pred_check_branch
        %152 = sbr.rel (%p150) target = $region16
      $region15: #{tpu_custom_call.1} parent=11 // pred_region
        _
      $region16: #{tpu_custom_call.1} parent=11 // pred_fallthru
        _
    $region12: #{tpu_custom_call.1} parent=5 // pred_fallthru
      _
    %p153 = scmp.lt.s32.totalorder %s10, 2
    // Predicated region
    $region17: #{tpu_custom_call.1} parent=5 // pred_check
      %p154 = pneg %p153
    $region18: #{tpu_custom_call.1} parent=5 // pred_check_branch
      %156 = sbr.rel (%p154) target = $region20
    $region19: #{tpu_custom_call.1} parent=5 // pred_region
      // Predicated region
      $region21: #{tpu_custom_call.1} parent=19 // pred_check
        %p157 = pneg %p30
      $region22: #{tpu_custom_call.1} parent=19 // pred_check_branch
        %159 = sbr.rel (%p157) target = $region24
      $region23: #{tpu_custom_call.1} parent=19 // pred_region
        %s160 = smul.u32 4, %s10
        %p161 = scmp.lt.s32.totalorder %s160, 7
        %s162 = scalar_select %p161, %s160, 7
        %s163 = smul.addr %s162, 8
        %s164 = smul.addr %s163, 8
        %s165 = scalar_lea.vmem %s0, %s164
        %s166 = smul.u32 4, %s10
      $region24: #{tpu_custom_call.1} parent=19 // pred_fallthru
        _
      // Predicated region
      $region25: #{tpu_custom_call.1} parent=19 // pred_check
        %p167 = pneg %p56
      $region26: #{tpu_custom_call.1} parent=19 // pred_check_branch
        %169 = sbr.rel (%p167) target = $region28
      $region27: #{tpu_custom_call.1} parent=19 // pred_region
        %s170 = smul.u32 4, %s10
        %p171 = scmp.lt.s32.totalorder %s170, 7
        %s172 = scalar_select %p171, %s170, 7
        %s173 = smul.addr %s172, 8
        %s174 = smul.addr %s173, 8
        %s175 = scalar_lea.vmem %s1, %s174
        %s176 = smul.u32 4, %s10
      $region28: #{tpu_custom_call.1} parent=19 // pred_fallthru
        _
      // Predicated region
      $region29: #{tpu_custom_call.1} parent=19 // pred_check
        %p177 = pneg %p82
      $region30: #{tpu_custom_call.1} parent=19 // pred_check_branch
        %179 = sbr.rel (%p177) target = $region32
      $region31: #{tpu_custom_call.1} parent=19 // pred_region
        %s180 = smul.u32 4, %s10
        %p181 = scmp.lt.s32.totalorder %s180, 7
        %s182 = scalar_select %p181, %s180, 7
        %s183 = smul.addr %s182, 8
        %s184 = smul.addr %s183, 8
        %s185 = scalar_lea.vmem %s2, %s184
        %s186 = smul.u32 4, %s10
      $region32: #{tpu_custom_call.1} parent=19 // pred_fallthru
        _
    $region20: #{tpu_custom_call.1} parent=5 // pred_fallthru
      _
    %p187 = scmp.le.s32.totalorder 1, %s10
    %p188 = scmp.lt.s32.totalorder %s10, 3
    %p189 = pnand %p187, %p188
    %p190 = pneg %p189
    // Predicated region
    $region33: #{tpu_custom_call.1} parent=5 // pred_check
      _
    $region34: #{tpu_custom_call.1} parent=5 // pred_check_branch
      %192 = sbr.rel (%p189) target = $region36
    $region35: #{tpu_custom_call.1} parent=5 // pred_region
      %s193 = ssub.s32 %s10, 1
      %s194 = smul.u32 4, %s15
      %p195 = scmp.lt.s32.totalorder %s194, 7
      %s196 = scalar_select %p195, %s194, 7
      %s197 = smul.addr %s196, 8
      %s198 = smul.addr %s197, 8
      %s199 = scalar_lea.vmem %s0, %s198
      %p200 = pneg %p36
      %p201 = pneg %p33
      %s202 = smul.u32 4, %s15
      %p203 = scmp.lt.s32.totalorder %s202, 7
      %s204 = scalar_select %p203, %s202, 7
      %s205 = smul.addr %s204, 8
      %s206 = smul.addr %s205, 8
      %s207 = scalar_lea.vmem %s1, %s206
      %p208 = pneg %p62
      %p209 = pneg %p59
      %s210 = smul.u32 4, %s15
      %p211 = scmp.lt.s32.totalorder %s210, 7
      %s212 = scalar_select %p211, %s210, 7
      %s213 = smul.addr %s212, 8
      %s214 = smul.addr %s213, 8
      %s215 = scalar_lea.vmem %s2, %s214
      %p216 = pneg %p88
      %p217 = pneg %p85
      %p218 = pneg %p109
      %p219 = pneg %p106
      %p220 = pneg %p135
      %p221 = pneg %p132
      %s222 = smul.u32 4, %s15
      %p223 = scmp.lt.s32.totalorder %s222, 7
      %s224 = scalar_select %p223, %s222, 7
      %s225 = smul.addr %s224, 8
      %s226 = smul.addr %s225, 8
      %s227 = scalar_lea.vmem %s4, %s226
      %s228 = smul.u32 4, %s15
      %p229 = scmp.lt.s32.totalorder %s228, 7
      %s230 = scalar_select %p229, %s228, 7
      %s231 = smul.addr %s230, 8
      %s232 = smul.addr %s231, 8
      %s233 = scalar_lea.vmem %s0, %s232
      %s234 = smul.u32 4, %s15
      %s235 = smul.u32 4, %s15
      %p236 = scmp.lt.s32.totalorder %s235, 7
      %s237 = scalar_select %p236, %s235, 7
      %s238 = smul.addr %s237, 8
      %s239 = smul.addr %s238, 8
      %s240 = scalar_lea.vmem %s1, %s239
      %s241 = smul.u32 4, %s15
      %s242 = smul.u32 4, %s15
      %p243 = scmp.lt.s32.totalorder %s242, 7
      %s244 = scalar_select %p243, %s242, 7
      %s245 = smul.addr %s244, 8
      %s246 = smul.addr %s245, 8
      %s247 = scalar_lea.vmem %s2, %s246
      %s248 = smul.u32 4, %s15
      %s249 = smul.u32 4, %s15
      %p250 = scmp.lt.s32.totalorder %s249, 7
      %s251 = scalar_select %p250, %s249, 7
      %s252 = smul.addr %s251, 8
      %s253 = smul.addr %s252, 8
      %s254 = scalar_lea.vmem %s4, %s253
      %s255 = smul.u32 4, %s15
      %v256 = vld [vmem:[%s233] sm:$0xff]
      %v257 = vld [vmem:[%s233 + $0x8] sm:$0xff]
      %v258 = vld [vmem:[%s233 + $0x10] sm:$0xff]
      %v259 = vld [vmem:[%s233 + $0x18] sm:$0xff]
      %v260 = vld [vmem:[%s233 + $0x20] sm:$0xff]
      %v261 = vld [vmem:[%s233 + $0x28] sm:$0xff]
      %v262 = vld [vmem:[%s233 + $0x30] sm:$0xff]
      %v263 = vld [vmem:[%s233 + $0x38] sm:$0xff]
      %v264 = vld [vmem:[%s233 + $0x40] sm:$0xff]
      %v265 = vld [vmem:[%s233 + $0x48] sm:$0xff]
      %v266 = vld [vmem:[%s233 + $0x50] sm:$0xff]
      %v267 = vld [vmem:[%s233 + $0x58] sm:$0xff]
      %v268 = vld [vmem:[%s233 + $0x60] sm:$0xff]
      %v269 = vld [vmem:[%s233 + $0x68] sm:$0xff]
      %v270 = vld [vmem:[%s233 + $0x70] sm:$0xff]
      %v271 = vld [vmem:[%s233 + $0x78] sm:$0xff]
      %v272 = vld [vmem:[%s233 + $0x80] sm:$0xff]
      %v273 = vld [vmem:[%s233 + $0x88] sm:$0xff]
      %v274 = vld [vmem:[%s233 + $0x90] sm:$0xff]
      %v275 = vld [vmem:[%s233 + $0x98] sm:$0xff]
      %v276 = vld [vmem:[%s233 + $0xa0] sm:$0xff]
      %v277 = vld [vmem:[%s233 + $0xa8] sm:$0xff]
      %v278 = vld [vmem:[%s233 + $0xb0] sm:$0xff]
      %v279 = vld [vmem:[%s233 + $0xb8] sm:$0xff]
      %v280 = vld [vmem:[%s233 + $0xc0] sm:$0xff]
      %v281 = vld [vmem:[%s233 + $0xc8] sm:$0xff]
      %v282 = vld [vmem:[%s233 + $0xd0] sm:$0xff]
      %v283 = vld [vmem:[%s233 + $0xd8] sm:$0xff]
      %v284 = vld [vmem:[%s233 + $0xe0] sm:$0xff]
      %v285 = vld [vmem:[%s233 + $0xe8] sm:$0xff]
      %v286 = vld [vmem:[%s233 + $0xf0] sm:$0xff]
      %v287 = vld [vmem:[%s233 + $0xf8] sm:$0xff]
      %v288 = vmul.f32 %v256, 0.17677669
      %v289 = vmul.f32 %v257, 0.17677669
      %v290 = vmul.f32 %v258, 0.17677669
      %v291 = vmul.f32 %v259, 0.17677669
      %v292 = vmul.f32 %v260, 0.17677669
      %v293 = vmul.f32 %v261, 0.17677669
      %v294 = vmul.f32 %v262, 0.17677669
      %v295 = vmul.f32 %v263, 0.17677669
      %v296 = vmul.f32 %v264, 0.17677669
      %v297 = vmul.f32 %v265, 0.17677669
      %v298 = vmul.f32 %v266, 0.17677669
      %v299 = vmul.f32 %v267, 0.17677669
      %v300 = vmul.f32 %v268, 0.17677669
      %v301 = vmul.f32 %v269, 0.17677669
      %v302 = vmul.f32 %v270, 0.17677669
      %v303 = vmul.f32 %v271, 0.17677669
      %v304 = vmul.f32 %v272, 0.17677669
      %v305 = vmul.f32 %v273, 0.17677669
      %v306 = vmul.f32 %v274, 0.17677669
      %v307 = vmul.f32 %v275, 0.17677669
      %v308 = vmul.f32 %v276, 0.17677669
      %v309 = vmul.f32 %v277, 0.17677669
      %v310 = vmul.f32 %v278, 0.17677669
      %v311 = vmul.f32 %v279, 0.17677669
      %v312 = vmul.f32 %v280, 0.17677669
      %v313 = vmul.f32 %v281, 0.17677669
      %v314 = vmul.f32 %v282, 0.17677669
      %v315 = vmul.f32 %v283, 0.17677669
      %v316 = vmul.f32 %v284, 0.17677669
      %v317 = vmul.f32 %v285, 0.17677669
      %v318 = vmul.f32 %v286, 0.17677669
      %v319 = vmul.f32 %v287, 0.17677669
      %v320 = vld [vmem:[%s240] sm:$0xff]
      %v321 = vld [vmem:[%s240 + $0x8] sm:$0xff]
      %v322 = vld [vmem:[%s240 + $0x10] sm:$0xff]
      %v323 = vld [vmem:[%s240 + $0x18] sm:$0xff]
      %v324 = vld [vmem:[%s240 + $0x20] sm:$0xff]
      %v325 = vld [vmem:[%s240 + $0x28] sm:$0xff]
      %v326 = vld [vmem:[%s240 + $0x30] sm:$0xff]
      %v327 = vld [vmem:[%s240 + $0x38] sm:$0xff]
      %v328 = vld [vmem:[%s240 + $0x40] sm:$0xff]
      %v329 = vld [vmem:[%s240 + $0x48] sm:$0xff]
      %v330 = vld [vmem:[%s240 + $0x50] sm:$0xff]
      %v331 = vld [vmem:[%s240 + $0x58] sm:$0xff]
      %v332 = vld [vmem:[%s240 + $0x60] sm:$0xff]
      %v333 = vld [vmem:[%s240 + $0x68] sm:$0xff]
      %v334 = vld [vmem:[%s240 + $0x70] sm:$0xff]
      %v335 = vld [vmem:[%s240 + $0x78] sm:$0xff]
      %v336 = vld [vmem:[%s240 + $0x80] sm:$0xff]
      %v337 = vld [vmem:[%s240 + $0x88] sm:$0xff]
      %v338 = vld [vmem:[%s240 + $0x90] sm:$0xff]
      %v339 = vld [vmem:[%s240 + $0x98] sm:$0xff]
      %v340 = vld [vmem:[%s240 + $0xa0] sm:$0xff]
      %v341 = vld [vmem:[%s240 + $0xa8] sm:$0xff]
      %v342 = vld [vmem:[%s240 + $0xb0] sm:$0xff]
      %v343 = vld [vmem:[%s240 + $0xb8] sm:$0xff]
      %v344 = vld [vmem:[%s240 + $0xc0] sm:$0xff]
      %v345 = vld [vmem:[%s240 + $0xc8] sm:$0xff]
      %v346 = vld [vmem:[%s240 + $0xd0] sm:$0xff]
      %v347 = vld [vmem:[%s240 + $0xd8] sm:$0xff]
      %v348 = vld [vmem:[%s240 + $0xe0] sm:$0xff]
      %v349 = vld [vmem:[%s240 + $0xe8] sm:$0xff]
      %v350 = vld [vmem:[%s240 + $0xf0] sm:$0xff]
      %v351 = vld [vmem:[%s240 + $0xf8] sm:$0xff]
      %v352 = vld [vmem:[%s247] sm:$0xff]
      %v353 = vld [vmem:[%s247 + $0x8] sm:$0xff]
      %v354 = vld [vmem:[%s247 + $0x10] sm:$0xff]
      %v355 = vld [vmem:[%s247 + $0x18] sm:$0xff]
      %v356 = vld [vmem:[%s247 + $0x20] sm:$0xff]
      %v357 = vld [vmem:[%s247 + $0x28] sm:$0xff]
      %v358 = vld [vmem:[%s247 + $0x30] sm:$0xff]
      %v359 = vld [vmem:[%s247 + $0x38] sm:$0xff]
      %v360 = vld [vmem:[%s247 + $0x40] sm:$0xff]
      %v361 = vld [vmem:[%s247 + $0x48] sm:$0xff]
      %v362 = vld [vmem:[%s247 + $0x50] sm:$0xff]
      %v363 = vld [vmem:[%s247 + $0x58] sm:$0xff]
      %v364 = vld [vmem:[%s247 + $0x60] sm:$0xff]
      %v365 = vld [vmem:[%s247 + $0x68] sm:$0xff]
      %v366 = vld [vmem:[%s247 + $0x70] sm:$0xff]
      %v367 = vld [vmem:[%s247 + $0x78] sm:$0xff]
      %v368 = vld [vmem:[%s247 + $0x80] sm:$0xff]
      %v369 = vld [vmem:[%s247 + $0x88] sm:$0xff]
      %v370 = vld [vmem:[%s247 + $0x90] sm:$0xff]
      %v371 = vld [vmem:[%s247 + $0x98] sm:$0xff]
      %v372 = vld [vmem:[%s247 + $0xa0] sm:$0xff]
      %v373 = vld [vmem:[%s247 + $0xa8] sm:$0xff]
      %v374 = vld [vmem:[%s247 + $0xb0] sm:$0xff]
      %v375 = vld [vmem:[%s247 + $0xb8] sm:$0xff]
      %v376 = vld [vmem:[%s247 + $0xc0] sm:$0xff]
      %v377 = vld [vmem:[%s247 + $0xc8] sm:$0xff]
      %v378 = vld [vmem:[%s247 + $0xd0] sm:$0xff]
      %v379 = vld [vmem:[%s247 + $0xd8] sm:$0xff]
      %v380 = vld [vmem:[%s247 + $0xe0] sm:$0xff]
      %v381 = vld [vmem:[%s247 + $0xe8] sm:$0xff]
      %v382 = vld [vmem:[%s247 + $0xf0] sm:$0xff]
      %v383 = vld [vmem:[%s247 + $0xf8] sm:$0xff]
      %v384 = vld [vmem:[%s3] sm:$0xff]
      %v385 = vld [vmem:[%s3 + $0x8] sm:$0xff]
      %v386 = vld [vmem:[%s3 + $0x10] sm:$0xff]
      %v387 = vld [vmem:[%s3 + $0x18] sm:$0xff]
      %v388 = vld [vmem:[%s3 + $0x20] sm:$0xff]
      %v389 = vld [vmem:[%s3 + $0x28] sm:$0xff]
      %v390 = vld [vmem:[%s3 + $0x30] sm:$0xff]
      %v391 = vld [vmem:[%s3 + $0x38] sm:$0xff]
      %vm392 = vcmask 261120
      %v394 = vsel %vm392, %v288, 0
      %v397 = vsel %vm392, %v289, 0
      %v400 = vsel %vm392, %v290, 0
      %v403 = vsel %vm392, %v291, 0
      %v406 = vsel %vm392, %v292, 0
      %v409 = vsel %vm392, %v293, 0
      %v412 = vsel %vm392, %v294, 0
      %v415 = vsel %vm392, %v295, 0
      %v418 = vsel %vm392, %v320, 0
      %v421 = vsel %vm392, %v321, 0
      %v424 = vsel %vm392, %v322, 0
      %v427 = vsel %vm392, %v323, 0
      %v430 = vsel %vm392, %v324, 0
      %v433 = vsel %vm392, %v325, 0
      %v436 = vsel %vm392, %v326, 0
      %v439 = vsel %vm392, %v327, 0
      %441 = vmatpush.xpose.msra.mxu0 0.0
      %442 = vmatpush.xpose.msra.mxu0 0.0
      %443 = vmatpush.xpose.msra.mxu0 0.0
      %444 = vmatpush.xpose.msra.mxu0 0.0
      %445 = vmatpush.xpose.msra.mxu0 0.0
      %446 = vmatpush.xpose.msra.mxu0 0.0
      %447 = vmatpush.xpose.msra.mxu0 0.0
      %448 = vmatpush.xpose.msra.mxu0 0.0
      %449 = vmatpush.xpose.msra.mxu0 %v439
      %450 = vmatpush.xpose.msra.mxu0 %v436
      %451 = vmatpush.xpose.msra.mxu0 %v433
      %452 = vmatpush.xpose.msra.mxu0 %v430
      %453 = vmatpush.xpose.msra.mxu0 %v427
      %454 = vmatpush.xpose.msra.mxu0 %v424
      %455 = vmatpush.xpose.msra.mxu0 %v421
      %456 = vmatpush.xpose.msra.mxu0 %v418
      %457 = vmatmul.f32.gmra.mxu0 %v394
      %v458 = vpop.f32.mrf.mxu0
      %v459 = vadd.f32 %v384, %v458
      %460 = vmatmul.f32.gmra.mxu0 %v397
      %v461 = vpop.f32.mrf.mxu0
      %v462 = vadd.f32 %v385, %v461
      %463 = vmatmul.f32.gmra.mxu0 %v400
      %v464 = vpop.f32.mrf.mxu0
      %v465 = vadd.f32 %v386, %v464
      %466 = vmatmul.f32.gmra.mxu0 %v403
      %v467 = vpop.f32.mrf.mxu0
      %v468 = vadd.f32 %v387, %v467
      %469 = vmatmul.f32.gmra.mxu0 %v406
      %v470 = vpop.f32.mrf.mxu0
      %v471 = vadd.f32 %v388, %v470
      %472 = vmatmul.f32.gmra.mxu0 %v409
      %v473 = vpop.f32.mrf.mxu0
      %v474 = vadd.f32 %v389, %v473
      %475 = vmatmul.f32.gmra.mxu0 %v412
      %v476 = vpop.f32.mrf.mxu0
      %v477 = vadd.f32 %v390, %v476
      %478 = vmatmul.f32.gmra.mxu0 %v415
      %v479 = vpop.f32.mrf.mxu0
      %v480 = vadd.f32 %v391, %v479
      %481 = vdwg.mxu0
      %v483 = vsel %vm392, %v296, 0
      %v486 = vsel %vm392, %v297, 0
      %v489 = vsel %vm392, %v298, 0
      %v492 = vsel %vm392, %v299, 0
      %v495 = vsel %vm392, %v300, 0
      %v498 = vsel %vm392, %v301, 0
      %v501 = vsel %vm392, %v302, 0
      %v504 = vsel %vm392, %v303, 0
      %v507 = vsel %vm392, %v328, 0
      %v510 = vsel %vm392, %v329, 0
      %v513 = vsel %vm392, %v330, 0
      %v516 = vsel %vm392, %v331, 0
      %v519 = vsel %vm392, %v332, 0
      %v522 = vsel %vm392, %v333, 0
      %v525 = vsel %vm392, %v334, 0
      %v528 = vsel %vm392, %v335, 0
      %530 = vmatpush.xpose.msra.mxu0 0.0
      %531 = vmatpush.xpose.msra.mxu0 0.0
      %532 = vmatpush.xpose.msra.mxu0 0.0
      %533 = vmatpush.xpose.msra.mxu0 0.0
      %534 = vmatpush.xpose.msra.mxu0 0.0
      %535 = vmatpush.xpose.msra.mxu0 0.0
      %536 = vmatpush.xpose.msra.mxu0 0.0
      %537 = vmatpush.xpose.msra.mxu0 0.0
      %538 = vmatpush.xpose.msra.mxu0 %v528
      %539 = vmatpush.xpose.msra.mxu0 %v525
      %540 = vmatpush.xpose.msra.mxu0 %v522
      %541 = vmatpush.xpose.msra.mxu0 %v519
      %542 = vmatpush.xpose.msra.mxu0 %v516
      %543 = vmatpush.xpose.msra.mxu0 %v513
      %544 = vmatpush.xpose.msra.mxu0 %v510
      %545 = vmatpush.xpose.msra.mxu0 %v507
      %546 = vmatmul.f32.gmra.mxu0 %v483
      %v547 = vpop.f32.mrf.mxu0
      %v548 = vadd.f32 %v384, %v547
      %549 = vmatmul.f32.gmra.mxu0 %v486
      %v550 = vpop.f32.mrf.mxu0
      %v551 = vadd.f32 %v385, %v550
      %552 = vmatmul.f32.gmra.mxu0 %v489
      %v553 = vpop.f32.mrf.mxu0
      %v554 = vadd.f32 %v386, %v553
      %555 = vmatmul.f32.gmra.mxu0 %v492
      %v556 = vpop.f32.mrf.mxu0
      %v557 = vadd.f32 %v387, %v556
      %558 = vmatmul.f32.gmra.mxu0 %v495
      %v559 = vpop.f32.mrf.mxu0
      %v560 = vadd.f32 %v388, %v559
      %561 = vmatmul.f32.gmra.mxu0 %v498
      %v562 = vpop.f32.mrf.mxu0
      %v563 = vadd.f32 %v389, %v562
      %564 = vmatmul.f32.gmra.mxu0 %v501
      %v565 = vpop.f32.mrf.mxu0
      %v566 = vadd.f32 %v390, %v565
      %567 = vmatmul.f32.gmra.mxu0 %v504
      %v568 = vpop.f32.mrf.mxu0
      %v569 = vadd.f32 %v391, %v568
      %570 = vdwg.mxu0
      %v572 = vsel %vm392, %v304, 0
      %v575 = vsel %vm392, %v305, 0
      %v578 = vsel %vm392, %v306, 0
      %v581 = vsel %vm392, %v307, 0
      %v584 = vsel %vm392, %v308, 0
      %v587 = vsel %vm392, %v309, 0
      %v590 = vsel %vm392, %v310, 0
      %v593 = vsel %vm392, %v311, 0
      %v596 = vsel %vm392, %v336, 0
      %v599 = vsel %vm392, %v337, 0
      %v602 = vsel %vm392, %v338, 0
      %v605 = vsel %vm392, %v339, 0
      %v608 = vsel %vm392, %v340, 0
      %v611 = vsel %vm392, %v341, 0
      %v614 = vsel %vm392, %v342, 0
      %v617 = vsel %vm392, %v343, 0
      %619 = vmatpush.xpose.msra.mxu0 0.0
      %620 = vmatpush.xpose.msra.mxu0 0.0
      %621 = vmatpush.xpose.msra.mxu0 0.0
      %622 = vmatpush.xpose.msra.mxu0 0.0
      %623 = vmatpush.xpose.msra.mxu0 0.0
      %624 = vmatpush.xpose.msra.mxu0 0.0
      %625 = vmatpush.xpose.msra.mxu0 0.0
      %626 = vmatpush.xpose.msra.mxu0 0.0
      %627 = vmatpush.xpose.msra.mxu0 %v617
      %628 = vmatpush.xpose.msra.mxu0 %v614
      %629 = vmatpush.xpose.msra.mxu0 %v611
      %630 = vmatpush.xpose.msra.mxu0 %v608
      %631 = vmatpush.xpose.msra.mxu0 %v605
      %632 = vmatpush.xpose.msra.mxu0 %v602
      %633 = vmatpush.xpose.msra.mxu0 %v599
      %634 = vmatpush.xpose.msra.mxu0 %v596
      %635 = vmatmul.f32.gmra.mxu0 %v572
      %v636 = vpop.f32.mrf.mxu0
      %v637 = vadd.f32 %v384, %v636
      %638 = vmatmul.f32.gmra.mxu0 %v575
      %v639 = vpop.f32.mrf.mxu0
      %v640 = vadd.f32 %v385, %v639
      %641 = vmatmul.f32.gmra.mxu0 %v578
      %v642 = vpop.f32.mrf.mxu0
      %v643 = vadd.f32 %v386, %v642
      %644 = vmatmul.f32.gmra.mxu0 %v581
      %v645 = vpop.f32.mrf.mxu0
      %v646 = vadd.f32 %v387, %v645
      %647 = vmatmul.f32.gmra.mxu0 %v584
      %v648 = vpop.f32.mrf.mxu0
      %v649 = vadd.f32 %v388, %v648
      %650 = vmatmul.f32.gmra.mxu0 %v587
      %v651 = vpop.f32.mrf.mxu0
      %v652 = vadd.f32 %v389, %v651
      %653 = vmatmul.f32.gmra.mxu0 %v590
      %v654 = vpop.f32.mrf.mxu0
      %v655 = vadd.f32 %v390, %v654
      %656 = vmatmul.f32.gmra.mxu0 %v593
      %v657 = vpop.f32.mrf.mxu0
      %v658 = vadd.f32 %v391, %v657
      %659 = vdwg.mxu0
      %v661 = vsel %vm392, %v312, 0
      %v664 = vsel %vm392, %v313, 0
      %v667 = vsel %vm392, %v314, 0
      %v670 = vsel %vm392, %v315, 0
      %v673 = vsel %vm392, %v316, 0
      %v676 = vsel %vm392, %v317, 0
      %v679 = vsel %vm392, %v318, 0
      %v682 = vsel %vm392, %v319, 0
      %v685 = vsel %vm392, %v344, 0
      %v688 = vsel %vm392, %v345, 0
      %v691 = vsel %vm392, %v346, 0
      %v694 = vsel %vm392, %v347, 0
      %v697 = vsel %vm392, %v348, 0
      %v700 = vsel %vm392, %v349, 0
      %v703 = vsel %vm392, %v350, 0
      %v706 = vsel %vm392, %v351, 0
      %708 = vmatpush.xpose.msra.mxu0 0.0
      %709 = vmatpush.xpose.msra.mxu0 0.0
      %710 = vmatpush.xpose.msra.mxu0 0.0
      %711 = vmatpush.xpose.msra.mxu0 0.0
      %712 = vmatpush.xpose.msra.mxu0 0.0
      %713 = vmatpush.xpose.msra.mxu0 0.0
      %714 = vmatpush.xpose.msra.mxu0 0.0
      %715 = vmatpush.xpose.msra.mxu0 0.0
      %716 = vmatpush.xpose.msra.mxu0 %v706
      %717 = vmatpush.xpose.msra.mxu0 %v703
      %718 = vmatpush.xpose.msra.mxu0 %v700
      %719 = vmatpush.xpose.msra.mxu0 %v697
      %720 = vmatpush.xpose.msra.mxu0 %v694
      %721 = vmatpush.xpose.msra.mxu0 %v691
      %722 = vmatpush.xpose.msra.mxu0 %v688
      %723 = vmatpush.xpose.msra.mxu0 %v685
      %724 = vmatmul.f32.gmra.mxu0 %v661
      %v725 = vpop.f32.mrf.mxu0
      %v726 = vadd.f32 %v384, %v725
      %727 = vmatmul.f32.gmra.mxu0 %v664
      %v728 = vpop.f32.mrf.mxu0
      %v729 = vadd.f32 %v385, %v728
      %730 = vmatmul.f32.gmra.mxu0 %v667
      %v731 = vpop.f32.mrf.mxu0
      %v732 = vadd.f32 %v386, %v731
      %733 = vmatmul.f32.gmra.mxu0 %v670
      %v734 = vpop.f32.mrf.mxu0
      %v735 = vadd.f32 %v387, %v734
      %736 = vmatmul.f32.gmra.mxu0 %v673
      %v737 = vpop.f32.mrf.mxu0
      %v738 = vadd.f32 %v388, %v737
      %739 = vmatmul.f32.gmra.mxu0 %v676
      %v740 = vpop.f32.mrf.mxu0
      %v741 = vadd.f32 %v389, %v740
      %742 = vmatmul.f32.gmra.mxu0 %v679
      %v743 = vpop.f32.mrf.mxu0
      %v744 = vadd.f32 %v390, %v743
      %745 = vmatmul.f32.gmra.mxu0 %v682
      %v746 = vpop.f32.mrf.mxu0
      %v747 = vadd.f32 %v391, %v746
      %748 = vdwg.mxu0
      %vm749 = vcmask 523264
      %v750 = vsel %vm749, %v459, -inf
      %751 = vmax.xlane.f32.xlu0 %v750
      %v752 = vpop.xlane.xlu0 %751
      %v753 = vsel %vm749, %v462, -inf
      %754 = vmax.xlane.f32.xlu0 %v753
      %v755 = vpop.xlane.xlu0 %754
      %v756 = vsel %vm749, %v465, -inf
      %757 = vmax.xlane.f32.xlu0 %v756
      %v758 = vpop.xlane.xlu0 %757
      %v759 = vsel %vm749, %v468, -inf
      %760 = vmax.xlane.f32.xlu0 %v759
      %v761 = vpop.xlane.xlu0 %760
      %v762 = vsel %vm749, %v471, -inf
      %763 = vmax.xlane.f32.xlu0 %v762
      %v764 = vpop.xlane.xlu0 %763
      %v765 = vsel %vm749, %v474, -inf
      %766 = vmax.xlane.f32.xlu0 %v765
      %v767 = vpop.xlane.xlu0 %766
      %v768 = vsel %vm749, %v477, -inf
      %769 = vmax.xlane.f32.xlu0 %v768
      %v770 = vpop.xlane.xlu0 %769
      %v771 = vsel %vm749, %v480, -inf
      %772 = vmax.xlane.f32.xlu0 %v771
      %v773 = vpop.xlane.xlu0 %772
      %v774 = vsel %vm749, %v548, -inf
      %775 = vmax.xlane.f32.xlu0 %v774
      %v776 = vpop.xlane.xlu0 %775
      %v777 = vsel %vm749, %v551, -inf
      %778 = vmax.xlane.f32.xlu0 %v777
      %v779 = vpop.xlane.xlu0 %778
      %v780 = vsel %vm749, %v554, -inf
      %781 = vmax.xlane.f32.xlu0 %v780
      %v782 = vpop.xlane.xlu0 %781
      %v783 = vsel %vm749, %v557, -inf
      %784 = vmax.xlane.f32.xlu0 %v783
      %v785 = vpop.xlane.xlu0 %784
      %v786 = vsel %vm749, %v560, -inf
      %787 = vmax.xlane.f32.xlu0 %v786
      %v788 = vpop.xlane.xlu0 %787
      %v789 = vsel %vm749, %v563, -inf
      %790 = vmax.xlane.f32.xlu0 %v789
      %v791 = vpop.xlane.xlu0 %790
      %v792 = vsel %vm749, %v566, -inf
      %793 = vmax.xlane.f32.xlu0 %v792
      %v794 = vpop.xlane.xlu0 %793
      %v795 = vsel %vm749, %v569, -inf
      %796 = vmax.xlane.f32.xlu0 %v795
      %v797 = vpop.xlane.xlu0 %796
      %v798 = vsel %vm749, %v637, -inf
      %799 = vmax.xlane.f32.xlu0 %v798
      %v800 = vpop.xlane.xlu0 %799
      %v801 = vsel %vm749, %v640, -inf
      %802 = vmax.xlane.f32.xlu0 %v801
      %v803 = vpop.xlane.xlu0 %802
      %v804 = vsel %vm749, %v643, -inf
      %805 = vmax.xlane.f32.xlu0 %v804
      %v806 = vpop.xlane.xlu0 %805
      %v807 = vsel %vm749, %v646, -inf
      %808 = vmax.xlane.f32.xlu0 %v807
      %v809 = vpop.xlane.xlu0 %808
      %v810 = vsel %vm749, %v649, -inf
      %811 = vmax.xlane.f32.xlu0 %v810
      %v812 = vpop.xlane.xlu0 %811
      %v813 = vsel %vm749, %v652, -inf
      %814 = vmax.xlane.f32.xlu0 %v813
      %v815 = vpop.xlane.xlu0 %814
      %v816 = vsel %vm749, %v655, -inf
      %817 = vmax.xlane.f32.xlu0 %v816
      %v818 = vpop.xlane.xlu0 %817
      %v819 = vsel %vm749, %v658, -inf
      %820 = vmax.xlane.f32.xlu0 %v819
      %v821 = vpop.xlane.xlu0 %820
      %v822 = vsel %vm749, %v726, -inf
      %823 = vmax.xlane.f32.xlu0 %v822
      %v824 = vpop.xlane.xlu0 %823
      %v825 = vsel %vm749, %v729, -inf
      %826 = vmax.xlane.f32.xlu0 %v825
      %v827 = vpop.xlane.xlu0 %826
      %v828 = vsel %vm749, %v732, -inf
      %829 = vmax.xlane.f32.xlu0 %v828
      %v830 = vpop.xlane.xlu0 %829
      %v831 = vsel %vm749, %v735, -inf
      %832 = vmax.xlane.f32.xlu0 %v831
      %v833 = vpop.xlane.xlu0 %832
      %v834 = vsel %vm749, %v738, -inf
      %835 = vmax.xlane.f32.xlu0 %v834
      %v836 = vpop.xlane.xlu0 %835
      %v837 = vsel %vm749, %v741, -inf
      %838 = vmax.xlane.f32.xlu0 %v837
      %v839 = vpop.xlane.xlu0 %838
      %v840 = vsel %vm749, %v744, -inf
      %841 = vmax.xlane.f32.xlu0 %v840
      %v842 = vpop.xlane.xlu0 %841
      %v843 = vsel %vm749, %v747, -inf
      %844 = vmax.xlane.f32.xlu0 %v843
      %v845 = vpop.xlane.xlu0 %844
      %v846 = vsub.f32 %v459, %v752
      %v847 = vsub.f32 %v462, %v755
      %v848 = vsub.f32 %v465, %v758
      %v849 = vsub.f32 %v468, %v761
      %v850 = vsub.f32 %v471, %v764
      %v851 = vsub.f32 %v474, %v767
      %v852 = vsub.f32 %v477, %v770
      %v853 = vsub.f32 %v480, %v773
      %v854 = vsub.f32 %v548, %v776
      %v855 = vsub.f32 %v551, %v779
      %v856 = vsub.f32 %v554, %v782
      %v857 = vsub.f32 %v557, %v785
      %v858 = vsub.f32 %v560, %v788
      %v859 = vsub.f32 %v563, %v791
      %v860 = vsub.f32 %v566, %v794
      %v861 = vsub.f32 %v569, %v797
      %v862 = vsub.f32 %v637, %v800
      %v863 = vsub.f32 %v640, %v803
      %v864 = vsub.f32 %v643, %v806
      %v865 = vsub.f32 %v646, %v809
      %v866 = vsub.f32 %v649, %v812
      %v867 = vsub.f32 %v652, %v815
      %v868 = vsub.f32 %v655, %v818
      %v869 = vsub.f32 %v658, %v821
      %v870 = vsub.f32 %v726, %v824
      %v871 = vsub.f32 %v729, %v827
      %v872 = vsub.f32 %v732, %v830
      %v873 = vsub.f32 %v735, %v833
      %v874 = vsub.f32 %v738, %v836
      %v875 = vsub.f32 %v741, %v839
      %v876 = vsub.f32 %v744, %v842
      %v877 = vsub.f32 %v747, %v845
      %v878 = vmul.f32 %v846, 1.442695
      %v879 = vpow.pop %v878
      %v880 = vmul.f32 %v847, 1.442695
      %v881 = vpow.pop %v880
      %v882 = vmul.f32 %v848, 1.442695
      %v883 = vpow.pop %v882
      %v884 = vmul.f32 %v849, 1.442695
      %v885 = vpow.pop %v884
      %v886 = vmul.f32 %v850, 1.442695
      %v887 = vpow.pop %v886
      %v888 = vmul.f32 %v851, 1.442695
      %v889 = vpow.pop %v888
      %v890 = vmul.f32 %v852, 1.442695
      %v891 = vpow.pop %v890
      %v892 = vmul.f32 %v853, 1.442695
      %v893 = vpow.pop %v892
      %v894 = vmul.f32 %v854, 1.442695
      %v895 = vpow.pop %v894
      %v896 = vmul.f32 %v855, 1.442695
      %v897 = vpow.pop %v896
      %v898 = vmul.f32 %v856, 1.442695
      %v899 = vpow.pop %v898
      %v900 = vmul.f32 %v857, 1.442695
      %v901 = vpow.pop %v900
      %v902 = vmul.f32 %v858, 1.442695
      %v903 = vpow.pop %v902
      %v904 = vmul.f32 %v859, 1.442695
      %v905 = vpow.pop %v904
      %v906 = vmul.f32 %v860, 1.442695
      %v907 = vpow.pop %v906
      %v908 = vmul.f32 %v861, 1.442695
      %v909 = vpow.pop %v908
      %v910 = vmul.f32 %v862, 1.442695
      %v911 = vpow.pop %v910
      %v912 = vmul.f32 %v863, 1.442695
      %v913 = vpow.pop %v912
      %v914 = vmul.f32 %v864, 1.442695
      %v915 = vpow.pop %v914
      %v916 = vmul.f32 %v865, 1.442695
      %v917 = vpow.pop %v916
      %v918 = vmul.f32 %v866, 1.442695
      %v919 = vpow.pop %v918
      %v920 = vmul.f32 %v867, 1.442695
      %v921 = vpow.pop %v920
      %v922 = vmul.f32 %v868, 1.442695
      %v923 = vpow.pop %v922
      %v924 = vmul.f32 %v869, 1.442695
      %v925 = vpow.pop %v924
      %v926 = vmul.f32 %v870, 1.442695
      %v927 = vpow.pop %v926
      %v928 = vmul.f32 %v871, 1.442695
      %v929 = vpow.pop %v928
      %v930 = vmul.f32 %v872, 1.442695
      %v931 = vpow.pop %v930
      %v932 = vmul.f32 %v873, 1.442695
      %v933 = vpow.pop %v932
      %v934 = vmul.f32 %v874, 1.442695
      %v935 = vpow.pop %v934
      %v936 = vmul.f32 %v875, 1.442695
      %v937 = vpow.pop %v936
      %v938 = vmul.f32 %v876, 1.442695
      %v939 = vpow.pop %v938
      %v940 = vmul.f32 %v877, 1.442695
      %v941 = vpow.pop %v940
      %v942 = vsel %vm749, %v879, 0.0
      %943 = vadd.xlane.f32.xlu0 %v942
      %v944 = vpop.xlane.xlu0 %943
      %v945 = vsel %vm749, %v881, 0.0
      %946 = vadd.xlane.f32.xlu0 %v945
      %v947 = vpop.xlane.xlu0 %946
      %v948 = vsel %vm749, %v883, 0.0
      %949 = vadd.xlane.f32.xlu0 %v948
      %v950 = vpop.xlane.xlu0 %949
      %v951 = vsel %vm749, %v885, 0.0
      %952 = vadd.xlane.f32.xlu0 %v951
      %v953 = vpop.xlane.xlu0 %952
      %v954 = vsel %vm749, %v887, 0.0
      %955 = vadd.xlane.f32.xlu0 %v954
      %v956 = vpop.xlane.xlu0 %955
      %v957 = vsel %vm749, %v889, 0.0
      %958 = vadd.xlane.f32.xlu0 %v957
      %v959 = vpop.xlane.xlu0 %958
      %v960 = vsel %vm749, %v891, 0.0
      %961 = vadd.xlane.f32.xlu0 %v960
      %v962 = vpop.xlane.xlu0 %961
      %v963 = vsel %vm749, %v893, 0.0
      %964 = vadd.xlane.f32.xlu0 %v963
      %v965 = vpop.xlane.xlu0 %964
      %v966 = vsel %vm749, %v895, 0.0
      %967 = vadd.xlane.f32.xlu0 %v966
      %v968 = vpop.xlane.xlu0 %967
      %v969 = vsel %vm749, %v897, 0.0
      %970 = vadd.xlane.f32.xlu0 %v969
      %v971 = vpop.xlane.xlu0 %970
      %v972 = vsel %vm749, %v899, 0.0
      %973 = vadd.xlane.f32.xlu0 %v972
      %v974 = vpop.xlane.xlu0 %973
      %v975 = vsel %vm749, %v901, 0.0
      %976 = vadd.xlane.f32.xlu0 %v975
      %v977 = vpop.xlane.xlu0 %976
      %v978 = vsel %vm749, %v903, 0.0
      %979 = vadd.xlane.f32.xlu0 %v978
      %v980 = vpop.xlane.xlu0 %979
      %v981 = vsel %vm749, %v905, 0.0
      %982 = vadd.xlane.f32.xlu0 %v981
      %v983 = vpop.xlane.xlu0 %982
      %v984 = vsel %vm749, %v907, 0.0
      %985 = vadd.xlane.f32.xlu0 %v984
      %v986 = vpop.xlane.xlu0 %985
      %v987 = vsel %vm749, %v909, 0.0
      %988 = vadd.xlane.f32.xlu0 %v987
      %v989 = vpop.xlane.xlu0 %988
      %v990 = vsel %vm749, %v911, 0.0
      %991 = vadd.xlane.f32.xlu0 %v990
      %v992 = vpop.xlane.xlu0 %991
      %v993 = vsel %vm749, %v913, 0.0
      %994 = vadd.xlane.f32.xlu0 %v993
      %v995 = vpop.xlane.xlu0 %994
      %v996 = vsel %vm749, %v915, 0.0
      %997 = vadd.xlane.f32.xlu0 %v996
      %v998 = vpop.xlane.xlu0 %997
      %v999 = vsel %vm749, %v917, 0.0
      %1000 = vadd.xlane.f32.xlu0 %v999
      %v1001 = vpop.xlane.xlu0 %1000
      %v1002 = vsel %vm749, %v919, 0.0
      %1003 = vadd.xlane.f32.xlu0 %v1002
      %v1004 = vpop.xlane.xlu0 %1003
      %v1005 = vsel %vm749, %v921, 0.0
      %1006 = vadd.xlane.f32.xlu0 %v1005
      %v1007 = vpop.xlane.xlu0 %1006
      %v1008 = vsel %vm749, %v923, 0.0
      %1009 = vadd.xlane.f32.xlu0 %v1008
      %v1010 = vpop.xlane.xlu0 %1009
      %v1011 = vsel %vm749, %v925, 0.0
      %1012 = vadd.xlane.f32.xlu0 %v1011
      %v1013 = vpop.xlane.xlu0 %1012
      %v1014 = vsel %vm749, %v927, 0.0
      %1015 = vadd.xlane.f32.xlu0 %v1014
      %v1016 = vpop.xlane.xlu0 %1015
      %v1017 = vsel %vm749, %v929, 0.0
      %1018 = vadd.xlane.f32.xlu0 %v1017
      %v1019 = vpop.xlane.xlu0 %1018
      %v1020 = vsel %vm749, %v931, 0.0
      %1021 = vadd.xlane.f32.xlu0 %v1020
      %v1022 = vpop.xlane.xlu0 %1021
      %v1023 = vsel %vm749, %v933, 0.0
      %1024 = vadd.xlane.f32.xlu0 %v1023
      %v1025 = vpop.xlane.xlu0 %1024
      %v1026 = vsel %vm749, %v935, 0.0
      %1027 = vadd.xlane.f32.xlu0 %v1026
      %v1028 = vpop.xlane.xlu0 %1027
      %v1029 = vsel %vm749, %v937, 0.0
      %1030 = vadd.xlane.f32.xlu0 %v1029
      %v1031 = vpop.xlane.xlu0 %1030
      %v1032 = vsel %vm749, %v939, 0.0
      %1033 = vadd.xlane.f32.xlu0 %v1032
      %v1034 = vpop.xlane.xlu0 %1033
      %v1035 = vsel %vm749, %v941, 0.0
      %1036 = vadd.xlane.f32.xlu0 %v1035
      %v1037 = vpop.xlane.xlu0 %1036
      %v1038 = vrcp.pop %v944
      %v1039 = vmul.f32 %v944, %v1038
      %v1040 = vsub.f32 1.0, %v1039
      %v1041 = vmul.f32 %v1038, %v1040
      %v1042 = vadd.f32 %v1038, %v1041
      %vm1043 = vweird.f32 %v944
      %vm1044 = vweird.f32 %v1038
      %vm1045 = vmor %vm1043, %vm1044
      %v1046 = vsel %vm1045, %v1038, %v1042
      %v1047 = vand.u32 2147483647, %v944
      %vm1048 = vcmp.eq.f32.partialorder %v1047, 8.507059e+37
      %v1049 = vand.u32 %v944, 2147483648
      %v1050 = vor.u32 1.1754944e-38, %v1049
      %v1051 = vsel %vm1048, %v1050, %v1046
      %v1052 = vmul.f32 %v879, %v1051
      %v1053 = vrcp.pop %v947
      %v1054 = vmul.f32 %v947, %v1053
      %v1055 = vsub.f32 1.0, %v1054
      %v1056 = vmul.f32 %v1053, %v1055
      %v1057 = vadd.f32 %v1053, %v1056
      %vm1058 = vweird.f32 %v947
      %vm1059 = vweird.f32 %v1053
      %vm1060 = vmor %vm1058, %vm1059
      %v1061 = vsel %vm1060, %v1053, %v1057
      %v1062 = vand.u32 2147483647, %v947
      %vm1063 = vcmp.eq.f32.partialorder %v1062, 8.507059e+37
      %v1064 = vand.u32 %v947, 2147483648
      %v1065 = vor.u32 1.1754944e-38, %v1064
      %v1066 = vsel %vm1063, %v1065, %v1061
      %v1067 = vmul.f32 %v881, %v1066
      %v1068 = vrcp.pop %v950
      %v1069 = vmul.f32 %v950, %v1068
      %v1070 = vsub.f32 1.0, %v1069
      %v1071 = vmul.f32 %v1068, %v1070
      %v1072 = vadd.f32 %v1068, %v1071
      %vm1073 = vweird.f32 %v950
      %vm1074 = vweird.f32 %v1068
      %vm1075 = vmor %vm1073, %vm1074
      %v1076 = vsel %vm1075, %v1068, %v1072
      %v1077 = vand.u32 2147483647, %v950
      %vm1078 = vcmp.eq.f32.partialorder %v1077, 8.507059e+37
      %v1079 = vand.u32 %v950, 2147483648
      %v1080 = vor.u32 1.1754944e-38, %v1079
      %v1081 = vsel %vm1078, %v1080, %v1076
      %v1082 = vmul.f32 %v883, %v1081
      %v1083 = vrcp.pop %v953
      %v1084 = vmul.f32 %v953, %v1083
      %v1085 = vsub.f32 1.0, %v1084
      %v1086 = vmul.f32 %v1083, %v1085
      %v1087 = vadd.f32 %v1083, %v1086
      %vm1088 = vweird.f32 %v953
      %vm1089 = vweird.f32 %v1083
      %vm1090 = vmor %vm1088, %vm1089
      %v1091 = vsel %vm1090, %v1083, %v1087
      %v1092 = vand.u32 2147483647, %v953
      %vm1093 = vcmp.eq.f32.partialorder %v1092, 8.507059e+37
      %v1094 = vand.u32 %v953, 2147483648
      %v1095 = vor.u32 1.1754944e-38, %v1094
      %v1096 = vsel %vm1093, %v1095, %v1091
      %v1097 = vmul.f32 %v885, %v1096
      %v1098 = vrcp.pop %v956
      %v1099 = vmul.f32 %v956, %v1098
      %v1100 = vsub.f32 1.0, %v1099
      %v1101 = vmul.f32 %v1098, %v1100
      %v1102 = vadd.f32 %v1098, %v1101
      %vm1103 = vweird.f32 %v956
      %vm1104 = vweird.f32 %v1098
      %vm1105 = vmor %vm1103, %vm1104
      %v1106 = vsel %vm1105, %v1098, %v1102
      %v1107 = vand.u32 2147483647, %v956
      %vm1108 = vcmp.eq.f32.partialorder %v1107, 8.507059e+37
      %v1109 = vand.u32 %v956, 2147483648
      %v1110 = vor.u32 1.1754944e-38, %v1109
      %v1111 = vsel %vm1108, %v1110, %v1106
      %v1112 = vmul.f32 %v887, %v1111
      %v1113 = vrcp.pop %v959
      %v1114 = vmul.f32 %v959, %v1113
      %v1115 = vsub.f32 1.0, %v1114
      %v1116 = vmul.f32 %v1113, %v1115
      %v1117 = vadd.f32 %v1113, %v1116
      %vm1118 = vweird.f32 %v959
      %vm1119 = vweird.f32 %v1113
      %vm1120 = vmor %vm1118, %vm1119
      %v1121 = vsel %vm1120, %v1113, %v1117
      %v1122 = vand.u32 2147483647, %v959
      %vm1123 = vcmp.eq.f32.partialorder %v1122, 8.507059e+37
      %v1124 = vand.u32 %v959, 2147483648
      %v1125 = vor.u32 1.1754944e-38, %v1124
      %v1126 = vsel %vm1123, %v1125, %v1121
      %v1127 = vmul.f32 %v889, %v1126
      %v1128 = vrcp.pop %v962
      %v1129 = vmul.f32 %v962, %v1128
      %v1130 = vsub.f32 1.0, %v1129
      %v1131 = vmul.f32 %v1128, %v1130
      %v1132 = vadd.f32 %v1128, %v1131
      %vm1133 = vweird.f32 %v962
      %vm1134 = vweird.f32 %v1128
      %vm1135 = vmor %vm1133, %vm1134
      %v1136 = vsel %vm1135, %v1128, %v1132
      %v1137 = vand.u32 2147483647, %v962
      %vm1138 = vcmp.eq.f32.partialorder %v1137, 8.507059e+37
      %v1139 = vand.u32 %v962, 2147483648
      %v1140 = vor.u32 1.1754944e-38, %v1139
      %v1141 = vsel %vm1138, %v1140, %v1136
      %v1142 = vmul.f32 %v891, %v1141
      %v1143 = vrcp.pop %v965
      %v1144 = vmul.f32 %v965, %v1143
      %v1145 = vsub.f32 1.0, %v1144
      %v1146 = vmul.f32 %v1143, %v1145
      %v1147 = vadd.f32 %v1143, %v1146
      %vm1148 = vweird.f32 %v965
      %vm1149 = vweird.f32 %v1143
      %vm1150 = vmor %vm1148, %vm1149
      %v1151 = vsel %vm1150, %v1143, %v1147
      %v1152 = vand.u32 2147483647, %v965
      %vm1153 = vcmp.eq.f32.partialorder %v1152, 8.507059e+37
      %v1154 = vand.u32 %v965, 2147483648
      %v1155 = vor.u32 1.1754944e-38, %v1154
      %v1156 = vsel %vm1153, %v1155, %v1151
      %v1157 = vmul.f32 %v893, %v1156
      %v1158 = vrcp.pop %v968
      %v1159 = vmul.f32 %v968, %v1158
      %v1160 = vsub.f32 1.0, %v1159
      %v1161 = vmul.f32 %v1158, %v1160
      %v1162 = vadd.f32 %v1158, %v1161
      %vm1163 = vweird.f32 %v968
      %vm1164 = vweird.f32 %v1158
      %vm1165 = vmor %vm1163, %vm1164
      %v1166 = vsel %vm1165, %v1158, %v1162
      %v1167 = vand.u32 2147483647, %v968
      %vm1168 = vcmp.eq.f32.partialorder %v1167, 8.507059e+37
      %v1169 = vand.u32 %v968, 2147483648
      %v1170 = vor.u32 1.1754944e-38, %v1169
      %v1171 = vsel %vm1168, %v1170, %v1166
      %v1172 = vmul.f32 %v895, %v1171
      %v1173 = vrcp.pop %v971
      %v1174 = vmul.f32 %v971, %v1173
      %v1175 = vsub.f32 1.0, %v1174
      %v1176 = vmul.f32 %v1173, %v1175
      %v1177 = vadd.f32 %v1173, %v1176
      %vm1178 = vweird.f32 %v971
      %vm1179 = vweird.f32 %v1173
      %vm1180 = vmor %vm1178, %vm1179
      %v1181 = vsel %vm1180, %v1173, %v1177
      %v1182 = vand.u32 2147483647, %v971
      %vm1183 = vcmp.eq.f32.partialorder %v1182, 8.507059e+37
      %v1184 = vand.u32 %v971, 2147483648
      %v1185 = vor.u32 1.1754944e-38, %v1184
      %v1186 = vsel %vm1183, %v1185, %v1181
      %v1187 = vmul.f32 %v897, %v1186
      %v1188 = vrcp.pop %v974
      %v1189 = vmul.f32 %v974, %v1188
      %v1190 = vsub.f32 1.0, %v1189
      %v1191 = vmul.f32 %v1188, %v1190
      %v1192 = vadd.f32 %v1188, %v1191
      %vm1193 = vweird.f32 %v974
      %vm1194 = vweird.f32 %v1188
      %vm1195 = vmor %vm1193, %vm1194
      %v1196 = vsel %vm1195, %v1188, %v1192
      %v1197 = vand.u32 2147483647, %v974
      %vm1198 = vcmp.eq.f32.partialorder %v1197, 8.507059e+37
      %v1199 = vand.u32 %v974, 2147483648
      %v1200 = vor.u32 1.1754944e-38, %v1199
      %v1201 = vsel %vm1198, %v1200, %v1196
      %v1202 = vmul.f32 %v899, %v1201
      %v1203 = vrcp.pop %v977
      %v1204 = vmul.f32 %v977, %v1203
      %v1205 = vsub.f32 1.0, %v1204
      %v1206 = vmul.f32 %v1203, %v1205
      %v1207 = vadd.f32 %v1203, %v1206
      %vm1208 = vweird.f32 %v977
      %vm1209 = vweird.f32 %v1203
      %vm1210 = vmor %vm1208, %vm1209
      %v1211 = vsel %vm1210, %v1203, %v1207
      %v1212 = vand.u32 2147483647, %v977
      %vm1213 = vcmp.eq.f32.partialorder %v1212, 8.507059e+37
      %v1214 = vand.u32 %v977, 2147483648
      %v1215 = vor.u32 1.1754944e-38, %v1214
      %v1216 = vsel %vm1213, %v1215, %v1211
      %v1217 = vmul.f32 %v901, %v1216
      %v1218 = vrcp.pop %v980
      %v1219 = vmul.f32 %v980, %v1218
      %v1220 = vsub.f32 1.0, %v1219
      %v1221 = vmul.f32 %v1218, %v1220
      %v1222 = vadd.f32 %v1218, %v1221
      %vm1223 = vweird.f32 %v980
      %vm1224 = vweird.f32 %v1218
      %vm1225 = vmor %vm1223, %vm1224
      %v1226 = vsel %vm1225, %v1218, %v1222
      %v1227 = vand.u32 2147483647, %v980
      %vm1228 = vcmp.eq.f32.partialorder %v1227, 8.507059e+37
      %v1229 = vand.u32 %v980, 2147483648
      %v1230 = vor.u32 1.1754944e-38, %v1229
      %v1231 = vsel %vm1228, %v1230, %v1226
      %v1232 = vmul.f32 %v903, %v1231
      %v1233 = vrcp.pop %v983
      %v1234 = vmul.f32 %v983, %v1233
      %v1235 = vsub.f32 1.0, %v1234
      %v1236 = vmul.f32 %v1233, %v1235
      %v1237 = vadd.f32 %v1233, %v1236
      %vm1238 = vweird.f32 %v983
      %vm1239 = vweird.f32 %v1233
      %vm1240 = vmor %vm1238, %vm1239
      %v1241 = vsel %vm1240, %v1233, %v1237
      %v1242 = vand.u32 2147483647, %v983
      %vm1243 = vcmp.eq.f32.partialorder %v1242, 8.507059e+37
      %v1244 = vand.u32 %v983, 2147483648
      %v1245 = vor.u32 1.1754944e-38, %v1244
      %v1246 = vsel %vm1243, %v1245, %v1241
      %v1247 = vmul.f32 %v905, %v1246
      %v1248 = vrcp.pop %v986
      %v1249 = vmul.f32 %v986, %v1248
      %v1250 = vsub.f32 1.0, %v1249
      %v1251 = vmul.f32 %v1248, %v1250
      %v1252 = vadd.f32 %v1248, %v1251
      %vm1253 = vweird.f32 %v986
      %vm1254 = vweird.f32 %v1248
      %vm1255 = vmor %vm1253, %vm1254
      %v1256 = vsel %vm1255, %v1248, %v1252
      %v1257 = vand.u32 2147483647, %v986
      %vm1258 = vcmp.eq.f32.partialorder %v1257, 8.507059e+37
      %v1259 = vand.u32 %v986, 2147483648
      %v1260 = vor.u32 1.1754944e-38, %v1259
      %v1261 = vsel %vm1258, %v1260, %v1256
      %v1262 = vmul.f32 %v907, %v1261
      %v1263 = vrcp.pop %v989
      %v1264 = vmul.f32 %v989, %v1263
      %v1265 = vsub.f32 1.0, %v1264
      %v1266 = vmul.f32 %v1263, %v1265
      %v1267 = vadd.f32 %v1263, %v1266
      %vm1268 = vweird.f32 %v989
      %vm1269 = vweird.f32 %v1263
      %vm1270 = vmor %vm1268, %vm1269
      %v1271 = vsel %vm1270, %v1263, %v1267
      %v1272 = vand.u32 2147483647, %v989
      %vm1273 = vcmp.eq.f32.partialorder %v1272, 8.507059e+37
      %v1274 = vand.u32 %v989, 2147483648
      %v1275 = vor.u32 1.1754944e-38, %v1274
      %v1276 = vsel %vm1273, %v1275, %v1271
      %v1277 = vmul.f32 %v909, %v1276
      %v1278 = vrcp.pop %v992
      %v1279 = vmul.f32 %v992, %v1278
      %v1280 = vsub.f32 1.0, %v1279
      %v1281 = vmul.f32 %v1278, %v1280
      %v1282 = vadd.f32 %v1278, %v1281
      %vm1283 = vweird.f32 %v992
      %vm1284 = vweird.f32 %v1278
      %vm1285 = vmor %vm1283, %vm1284
      %v1286 = vsel %vm1285, %v1278, %v1282
      %v1287 = vand.u32 2147483647, %v992
      %vm1288 = vcmp.eq.f32.partialorder %v1287, 8.507059e+37
      %v1289 = vand.u32 %v992, 2147483648
      %v1290 = vor.u32 1.1754944e-38, %v1289
      %v1291 = vsel %vm1288, %v1290, %v1286
      %v1292 = vmul.f32 %v911, %v1291
      %v1293 = vrcp.pop %v995
      %v1294 = vmul.f32 %v995, %v1293
      %v1295 = vsub.f32 1.0, %v1294
      %v1296 = vmul.f32 %v1293, %v1295
      %v1297 = vadd.f32 %v1293, %v1296
      %vm1298 = vweird.f32 %v995
      %vm1299 = vweird.f32 %v1293
      %vm1300 = vmor %vm1298, %vm1299
      %v1301 = vsel %vm1300, %v1293, %v1297
      %v1302 = vand.u32 2147483647, %v995
      %vm1303 = vcmp.eq.f32.partialorder %v1302, 8.507059e+37
      %v1304 = vand.u32 %v995, 2147483648
      %v1305 = vor.u32 1.1754944e-38, %v1304
      %v1306 = vsel %vm1303, %v1305, %v1301
      %v1307 = vmul.f32 %v913, %v1306
      %v1308 = vrcp.pop %v998
      %v1309 = vmul.f32 %v998, %v1308
      %v1310 = vsub.f32 1.0, %v1309
      %v1311 = vmul.f32 %v1308, %v1310
      %v1312 = vadd.f32 %v1308, %v1311
      %vm1313 = vweird.f32 %v998
      %vm1314 = vweird.f32 %v1308
      %vm1315 = vmor %vm1313, %vm1314
      %v1316 = vsel %vm1315, %v1308, %v1312
      %v1317 = vand.u32 2147483647, %v998
      %vm1318 = vcmp.eq.f32.partialorder %v1317, 8.507059e+37
      %v1319 = vand.u32 %v998, 2147483648
      %v1320 = vor.u32 1.1754944e-38, %v1319
      %v1321 = vsel %vm1318, %v1320, %v1316
      %v1322 = vmul.f32 %v915, %v1321
      %v1323 = vrcp.pop %v1001
      %v1324 = vmul.f32 %v1001, %v1323
      %v1325 = vsub.f32 1.0, %v1324
      %v1326 = vmul.f32 %v1323, %v1325
      %v1327 = vadd.f32 %v1323, %v1326
      %vm1328 = vweird.f32 %v1001
      %vm1329 = vweird.f32 %v1323
      %vm1330 = vmor %vm1328, %vm1329
      %v1331 = vsel %vm1330, %v1323, %v1327
      %v1332 = vand.u32 2147483647, %v1001
      %vm1333 = vcmp.eq.f32.partialorder %v1332, 8.507059e+37
      %v1334 = vand.u32 %v1001, 2147483648
      %v1335 = vor.u32 1.1754944e-38, %v1334
      %v1336 = vsel %vm1333, %v1335, %v1331
      %v1337 = vmul.f32 %v917, %v1336
      %v1338 = vrcp.pop %v1004
      %v1339 = vmul.f32 %v1004, %v1338
      %v1340 = vsub.f32 1.0, %v1339
      %v1341 = vmul.f32 %v1338, %v1340
      %v1342 = vadd.f32 %v1338, %v1341
      %vm1343 = vweird.f32 %v1004
      %vm1344 = vweird.f32 %v1338
      %vm1345 = vmor %vm1343, %vm1344
      %v1346 = vsel %vm1345, %v1338, %v1342
      %v1347 = vand.u32 2147483647, %v1004
      %vm1348 = vcmp.eq.f32.partialorder %v1347, 8.507059e+37
      %v1349 = vand.u32 %v1004, 2147483648
      %v1350 = vor.u32 1.1754944e-38, %v1349
      %v1351 = vsel %vm1348, %v1350, %v1346
      %v1352 = vmul.f32 %v919, %v1351
      %v1353 = vrcp.pop %v1007
      %v1354 = vmul.f32 %v1007, %v1353
      %v1355 = vsub.f32 1.0, %v1354
      %v1356 = vmul.f32 %v1353, %v1355
      %v1357 = vadd.f32 %v1353, %v1356
      %vm1358 = vweird.f32 %v1007
      %vm1359 = vweird.f32 %v1353
      %vm1360 = vmor %vm1358, %vm1359
      %v1361 = vsel %vm1360, %v1353, %v1357
      %v1362 = vand.u32 2147483647, %v1007
      %vm1363 = vcmp.eq.f32.partialorder %v1362, 8.507059e+37
      %v1364 = vand.u32 %v1007, 2147483648
      %v1365 = vor.u32 1.1754944e-38, %v1364
      %v1366 = vsel %vm1363, %v1365, %v1361
      %v1367 = vmul.f32 %v921, %v1366
      %v1368 = vrcp.pop %v1010
      %v1369 = vmul.f32 %v1010, %v1368
      %v1370 = vsub.f32 1.0, %v1369
      %v1371 = vmul.f32 %v1368, %v1370
      %v1372 = vadd.f32 %v1368, %v1371
      %vm1373 = vweird.f32 %v1010
      %vm1374 = vweird.f32 %v1368
      %vm1375 = vmor %vm1373, %vm1374
      %v1376 = vsel %vm1375, %v1368, %v1372
      %v1377 = vand.u32 2147483647, %v1010
      %vm1378 = vcmp.eq.f32.partialorder %v1377, 8.507059e+37
      %v1379 = vand.u32 %v1010, 2147483648
      %v1380 = vor.u32 1.1754944e-38, %v1379
      %v1381 = vsel %vm1378, %v1380, %v1376
      %v1382 = vmul.f32 %v923, %v1381
      %v1383 = vrcp.pop %v1013
      %v1384 = vmul.f32 %v1013, %v1383
      %v1385 = vsub.f32 1.0, %v1384
      %v1386 = vmul.f32 %v1383, %v1385
      %v1387 = vadd.f32 %v1383, %v1386
      %vm1388 = vweird.f32 %v1013
      %vm1389 = vweird.f32 %v1383
      %vm1390 = vmor %vm1388, %vm1389
      %v1391 = vsel %vm1390, %v1383, %v1387
      %v1392 = vand.u32 2147483647, %v1013
      %vm1393 = vcmp.eq.f32.partialorder %v1392, 8.507059e+37
      %v1394 = vand.u32 %v1013, 2147483648
      %v1395 = vor.u32 1.1754944e-38, %v1394
      %v1396 = vsel %vm1393, %v1395, %v1391
      %v1397 = vmul.f32 %v925, %v1396
      %v1398 = vrcp.pop %v1016
      %v1399 = vmul.f32 %v1016, %v1398
      %v1400 = vsub.f32 1.0, %v1399
      %v1401 = vmul.f32 %v1398, %v1400
      %v1402 = vadd.f32 %v1398, %v1401
      %vm1403 = vweird.f32 %v1016
      %vm1404 = vweird.f32 %v1398
      %vm1405 = vmor %vm1403, %vm1404
      %v1406 = vsel %vm1405, %v1398, %v1402
      %v1407 = vand.u32 2147483647, %v1016
      %vm1408 = vcmp.eq.f32.partialorder %v1407, 8.507059e+37
      %v1409 = vand.u32 %v1016, 2147483648
      %v1410 = vor.u32 1.1754944e-38, %v1409
      %v1411 = vsel %vm1408, %v1410, %v1406
      %v1412 = vmul.f32 %v927, %v1411
      %v1413 = vrcp.pop %v1019
      %v1414 = vmul.f32 %v1019, %v1413
      %v1415 = vsub.f32 1.0, %v1414
      %v1416 = vmul.f32 %v1413, %v1415
      %v1417 = vadd.f32 %v1413, %v1416
      %vm1418 = vweird.f32 %v1019
      %vm1419 = vweird.f32 %v1413
      %vm1420 = vmor %vm1418, %vm1419
      %v1421 = vsel %vm1420, %v1413, %v1417
      %v1422 = vand.u32 2147483647, %v1019
      %vm1423 = vcmp.eq.f32.partialorder %v1422, 8.507059e+37
      %v1424 = vand.u32 %v1019, 2147483648
      %v1425 = vor.u32 1.1754944e-38, %v1424
      %v1426 = vsel %vm1423, %v1425, %v1421
      %v1427 = vmul.f32 %v929, %v1426
      %v1428 = vrcp.pop %v1022
      %v1429 = vmul.f32 %v1022, %v1428
      %v1430 = vsub.f32 1.0, %v1429
      %v1431 = vmul.f32 %v1428, %v1430
      %v1432 = vadd.f32 %v1428, %v1431
      %vm1433 = vweird.f32 %v1022
      %vm1434 = vweird.f32 %v1428
      %vm1435 = vmor %vm1433, %vm1434
      %v1436 = vsel %vm1435, %v1428, %v1432
      %v1437 = vand.u32 2147483647, %v1022
      %vm1438 = vcmp.eq.f32.partialorder %v1437, 8.507059e+37
      %v1439 = vand.u32 %v1022, 2147483648
      %v1440 = vor.u32 1.1754944e-38, %v1439
      %v1441 = vsel %vm1438, %v1440, %v1436
      %v1442 = vmul.f32 %v931, %v1441
      %v1443 = vrcp.pop %v1025
      %v1444 = vmul.f32 %v1025, %v1443
      %v1445 = vsub.f32 1.0, %v1444
      %v1446 = vmul.f32 %v1443, %v1445
      %v1447 = vadd.f32 %v1443, %v1446
      %vm1448 = vweird.f32 %v1025
      %vm1449 = vweird.f32 %v1443
      %vm1450 = vmor %vm1448, %vm1449
      %v1451 = vsel %vm1450, %v1443, %v1447
      %v1452 = vand.u32 2147483647, %v1025
      %vm1453 = vcmp.eq.f32.partialorder %v1452, 8.507059e+37
      %v1454 = vand.u32 %v1025, 2147483648
      %v1455 = vor.u32 1.1754944e-38, %v1454
      %v1456 = vsel %vm1453, %v1455, %v1451
      %v1457 = vmul.f32 %v933, %v1456
      %v1458 = vrcp.pop %v1028
      %v1459 = vmul.f32 %v1028, %v1458
      %v1460 = vsub.f32 1.0, %v1459
      %v1461 = vmul.f32 %v1458, %v1460
      %v1462 = vadd.f32 %v1458, %v1461
      %vm1463 = vweird.f32 %v1028
      %vm1464 = vweird.f32 %v1458
      %vm1465 = vmor %vm1463, %vm1464
      %v1466 = vsel %vm1465, %v1458, %v1462
      %v1467 = vand.u32 2147483647, %v1028
      %vm1468 = vcmp.eq.f32.partialorder %v1467, 8.507059e+37
      %v1469 = vand.u32 %v1028, 2147483648
      %v1470 = vor.u32 1.1754944e-38, %v1469
      %v1471 = vsel %vm1468, %v1470, %v1466
      %v1472 = vmul.f32 %v935, %v1471
      %v1473 = vrcp.pop %v1031
      %v1474 = vmul.f32 %v1031, %v1473
      %v1475 = vsub.f32 1.0, %v1474
      %v1476 = vmul.f32 %v1473, %v1475
      %v1477 = vadd.f32 %v1473, %v1476
      %vm1478 = vweird.f32 %v1031
      %vm1479 = vweird.f32 %v1473
      %vm1480 = vmor %vm1478, %vm1479
      %v1481 = vsel %vm1480, %v1473, %v1477
      %v1482 = vand.u32 2147483647, %v1031
      %vm1483 = vcmp.eq.f32.partialorder %v1482, 8.507059e+37
      %v1484 = vand.u32 %v1031, 2147483648
      %v1485 = vor.u32 1.1754944e-38, %v1484
      %v1486 = vsel %vm1483, %v1485, %v1481
      %v1487 = vmul.f32 %v937, %v1486
      %v1488 = vrcp.pop %v1034
      %v1489 = vmul.f32 %v1034, %v1488
      %v1490 = vsub.f32 1.0, %v1489
      %v1491 = vmul.f32 %v1488, %v1490
      %v1492 = vadd.f32 %v1488, %v1491
      %vm1493 = vweird.f32 %v1034
      %vm1494 = vweird.f32 %v1488
      %vm1495 = vmor %vm1493, %vm1494
      %v1496 = vsel %vm1495, %v1488, %v1492
      %v1497 = vand.u32 2147483647, %v1034
      %vm1498 = vcmp.eq.f32.partialorder %v1497, 8.507059e+37
      %v1499 = vand.u32 %v1034, 2147483648
      %v1500 = vor.u32 1.1754944e-38, %v1499
      %v1501 = vsel %vm1498, %v1500, %v1496
      %v1502 = vmul.f32 %v939, %v1501
      %v1503 = vrcp.pop %v1037
      %v1504 = vmul.f32 %v1037, %v1503
      %v1505 = vsub.f32 1.0, %v1504
      %v1506 = vmul.f32 %v1503, %v1505
      %v1507 = vadd.f32 %v1503, %v1506
      %vm1508 = vweird.f32 %v1037
      %vm1509 = vweird.f32 %v1503
      %vm1510 = vmor %vm1508, %vm1509
      %v1511 = vsel %vm1510, %v1503, %v1507
      %v1512 = vand.u32 2147483647, %v1037
      %vm1513 = vcmp.eq.f32.partialorder %v1512, 8.507059e+37
      %v1514 = vand.u32 %v1037, 2147483648
      %v1515 = vor.u32 1.1754944e-38, %v1514
      %v1516 = vsel %vm1513, %v1515, %v1511
      %v1517 = vmul.f32 %v941, %v1516
      %v1519 = vsel %vm749, %v1052, 0
      %v1522 = vsel %vm749, %v1067, 0
      %v1525 = vsel %vm749, %v1082, 0
      %v1528 = vsel %vm749, %v1097, 0
      %v1531 = vsel %vm749, %v1112, 0
      %v1534 = vsel %vm749, %v1127, 0
      %v1537 = vsel %vm749, %v1142, 0
      %v1540 = vsel %vm749, %v1157, 0
      %1542 = vmatpush.msra.mxu0 0.0
      %1543 = vmatpush.msra.mxu0 0.0
      %1544 = vmatpush.msra.mxu0 0.0
      %1545 = vmatpush.msra.mxu0 0.0
      %1546 = vmatpush.msra.mxu0 0.0
      %1547 = vmatpush.msra.mxu0 0.0
      %1548 = vmatpush.msra.mxu0 0.0
      %1549 = vmatpush.msra.mxu0 0.0
      %1550 = vmatpush.msra.mxu0 %v359
      %1551 = vmatpush.msra.mxu0 %v358
      %1552 = vmatpush.msra.mxu0 %v357
      %1553 = vmatpush.msra.mxu0 %v356
      %1554 = vmatpush.msra.mxu0 %v355
      %1555 = vmatpush.msra.mxu0 %v354
      %1556 = vmatpush.msra.mxu0 %v353
      %1557 = vmatpush.msra.mxu0 %v352
      %1558 = vmatmul.f32.gmra.mxu0 %v1519
      %v1559 = vpop.f32.mrf.mxu0
      %v1560 = vadd.f32 0.0, %v1559
      %1561 = vmatmul.f32.gmra.mxu0 %v1522
      %v1562 = vpop.f32.mrf.mxu0
      %v1563 = vadd.f32 0.0, %v1562
      %1564 = vmatmul.f32.gmra.mxu0 %v1525
      %v1565 = vpop.f32.mrf.mxu0
      %v1566 = vadd.f32 0.0, %v1565
      %1567 = vmatmul.f32.gmra.mxu0 %v1528
      %v1568 = vpop.f32.mrf.mxu0
      %v1569 = vadd.f32 0.0, %v1568
      %1570 = vmatmul.f32.gmra.mxu0 %v1531
      %v1571 = vpop.f32.mrf.mxu0
      %v1572 = vadd.f32 0.0, %v1571
      %1573 = vmatmul.f32.gmra.mxu0 %v1534
      %v1574 = vpop.f32.mrf.mxu0
      %v1575 = vadd.f32 0.0, %v1574
      %1576 = vmatmul.f32.gmra.mxu0 %v1537
      %v1577 = vpop.f32.mrf.mxu0
      %v1578 = vadd.f32 0.0, %v1577
      %1579 = vmatmul.f32.gmra.mxu0 %v1540
      %v1580 = vpop.f32.mrf.mxu0
      %v1581 = vadd.f32 0.0, %v1580
      %1582 = vdwg.mxu0
      %v1584 = vsel %vm749, %v1172, 0
      %v1587 = vsel %vm749, %v1187, 0
      %v1590 = vsel %vm749, %v1202, 0
      %v1593 = vsel %vm749, %v1217, 0
      %v1596 = vsel %vm749, %v1232, 0
      %v1599 = vsel %vm749, %v1247, 0
      %v1602 = vsel %vm749, %v1262, 0
      %v1605 = vsel %vm749, %v1277, 0
      %1607 = vmatpush.msra.mxu0 0.0
      %1608 = vmatpush.msra.mxu0 0.0
      %1609 = vmatpush.msra.mxu0 0.0
      %1610 = vmatpush.msra.mxu0 0.0
      %1611 = vmatpush.msra.mxu0 0.0
      %1612 = vmatpush.msra.mxu0 0.0
      %1613 = vmatpush.msra.mxu0 0.0
      %1614 = vmatpush.msra.mxu0 0.0
      %1615 = vmatpush.msra.mxu0 %v367
      %1616 = vmatpush.msra.mxu0 %v366
      %1617 = vmatpush.msra.mxu0 %v365
      %1618 = vmatpush.msra.mxu0 %v364
      %1619 = vmatpush.msra.mxu0 %v363
      %1620 = vmatpush.msra.mxu0 %v362
      %1621 = vmatpush.msra.mxu0 %v361
      %1622 = vmatpush.msra.mxu0 %v360
      %1623 = vmatmul.f32.gmra.mxu0 %v1584
      %v1624 = vpop.f32.mrf.mxu0
      %v1625 = vadd.f32 0.0, %v1624
      %1626 = vmatmul.f32.gmra.mxu0 %v1587
      %v1627 = vpop.f32.mrf.mxu0
      %v1628 = vadd.f32 0.0, %v1627
      %1629 = vmatmul.f32.gmra.mxu0 %v1590
      %v1630 = vpop.f32.mrf.mxu0
      %v1631 = vadd.f32 0.0, %v1630
      %1632 = vmatmul.f32.gmra.mxu0 %v1593
      %v1633 = vpop.f32.mrf.mxu0
      %v1634 = vadd.f32 0.0, %v1633
      %1635 = vmatmul.f32.gmra.mxu0 %v1596
      %v1636 = vpop.f32.mrf.mxu0
      %v1637 = vadd.f32 0.0, %v1636
      %1638 = vmatmul.f32.gmra.mxu0 %v1599
      %v1639 = vpop.f32.mrf.mxu0
      %v1640 = vadd.f32 0.0, %v1639
      %1641 = vmatmul.f32.gmra.mxu0 %v1602
      %v1642 = vpop.f32.mrf.mxu0
      %v1643 = vadd.f32 0.0, %v1642
      %1644 = vmatmul.f32.gmra.mxu0 %v1605
      %v1645 = vpop.f32.mrf.mxu0
      %v1646 = vadd.f32 0.0, %v1645
      %1647 = vdwg.mxu0
      %v1649 = vsel %vm749, %v1292, 0
      %v1652 = vsel %vm749, %v1307, 0
      %v1655 = vsel %vm749, %v1322, 0
      %v1658 = vsel %vm749, %v1337, 0
      %v1661 = vsel %vm749, %v1352, 0
      %v1664 = vsel %vm749, %v1367, 0
      %v1667 = vsel %vm749, %v1382, 0
      %v1670 = vsel %vm749, %v1397, 0
      %1672 = vmatpush.msra.mxu0 0.0
      %1673 = vmatpush.msra.mxu0 0.0
      %1674 = vmatpush.msra.mxu0 0.0
      %1675 = vmatpush.msra.mxu0 0.0
      %1676 = vmatpush.msra.mxu0 0.0
      %1677 = vmatpush.msra.mxu0 0.0
      %1678 = vmatpush.msra.mxu0 0.0
      %1679 = vmatpush.msra.mxu0 0.0
      %1680 = vmatpush.msra.mxu0 %v375
      %1681 = vmatpush.msra.mxu0 %v374
      %1682 = vmatpush.msra.mxu0 %v373
      %1683 = vmatpush.msra.mxu0 %v372
      %1684 = vmatpush.msra.mxu0 %v371
      %1685 = vmatpush.msra.mxu0 %v370
      %1686 = vmatpush.msra.mxu0 %v369
      %1687 = vmatpush.msra.mxu0 %v368
      %1688 = vmatmul.f32.gmra.mxu0 %v1649
      %v1689 = vpop.f32.mrf.mxu0
      %v1690 = vadd.f32 0.0, %v1689
      %1691 = vmatmul.f32.gmra.mxu0 %v1652
      %v1692 = vpop.f32.mrf.mxu0
      %v1693 = vadd.f32 0.0, %v1692
      %1694 = vmatmul.f32.gmra.mxu0 %v1655
      %v1695 = vpop.f32.mrf.mxu0
      %v1696 = vadd.f32 0.0, %v1695
      %1697 = vmatmul.f32.gmra.mxu0 %v1658
      %v1698 = vpop.f32.mrf.mxu0
      %v1699 = vadd.f32 0.0, %v1698
      %1700 = vmatmul.f32.gmra.mxu0 %v1661
      %v1701 = vpop.f32.mrf.mxu0
      %v1702 = vadd.f32 0.0, %v1701
      %1703 = vmatmul.f32.gmra.mxu0 %v1664
      %v1704 = vpop.f32.mrf.mxu0
      %v1705 = vadd.f32 0.0, %v1704
      %1706 = vmatmul.f32.gmra.mxu0 %v1667
      %v1707 = vpop.f32.mrf.mxu0
      %v1708 = vadd.f32 0.0, %v1707
      %1709 = vmatmul.f32.gmra.mxu0 %v1670
      %v1710 = vpop.f32.mrf.mxu0
      %v1711 = vadd.f32 0.0, %v1710
      %1712 = vdwg.mxu0
      %v1714 = vsel %vm749, %v1412, 0
      %v1717 = vsel %vm749, %v1427, 0
      %v1720 = vsel %vm749, %v1442, 0
      %v1723 = vsel %vm749, %v1457, 0
      %v1726 = vsel %vm749, %v1472, 0
      %v1729 = vsel %vm749, %v1487, 0
      %v1732 = vsel %vm749, %v1502, 0
      %v1735 = vsel %vm749, %v1517, 0
      %1737 = vmatpush.msra.mxu0 0.0
      %1738 = vmatpush.msra.mxu0 0.0
      %1739 = vmatpush.msra.mxu0 0.0
      %1740 = vmatpush.msra.mxu0 0.0
      %1741 = vmatpush.msra.mxu0 0.0
      %1742 = vmatpush.msra.mxu0 0.0
      %1743 = vmatpush.msra.mxu0 0.0
      %1744 = vmatpush.msra.mxu0 0.0
      %1745 = vmatpush.msra.mxu0 %v383
      %1746 = vmatpush.msra.mxu0 %v382
      %1747 = vmatpush.msra.mxu0 %v381
      %1748 = vmatpush.msra.mxu0 %v380
      %1749 = vmatpush.msra.mxu0 %v379
      %1750 = vmatpush.msra.mxu0 %v378
      %1751 = vmatpush.msra.mxu0 %v377
      %1752 = vmatpush.msra.mxu0 %v376
      %1753 = vmatmul.f32.gmra.mxu0 %v1714
      %v1754 = vpop.f32.mrf.mxu0
      %v1755 = vadd.f32 0.0, %v1754
      %1756 = vmatmul.f32.gmra.mxu0 %v1717
      %v1757 = vpop.f32.mrf.mxu0
      %v1758 = vadd.f32 0.0, %v1757
      %1759 = vmatmul.f32.gmra.mxu0 %v1720
      %v1760 = vpop.f32.mrf.mxu0
      %v1761 = vadd.f32 0.0, %v1760
      %1762 = vmatmul.f32.gmra.mxu0 %v1723
      %v1763 = vpop.f32.mrf.mxu0
      %v1764 = vadd.f32 0.0, %v1763
      %1765 = vmatmul.f32.gmra.mxu0 %v1726
      %v1766 = vpop.f32.mrf.mxu0
      %v1767 = vadd.f32 0.0, %v1766
      %1768 = vmatmul.f32.gmra.mxu0 %v1729
      %v1769 = vpop.f32.mrf.mxu0
      %v1770 = vadd.f32 0.0, %v1769
      %1771 = vmatmul.f32.gmra.mxu0 %v1732
      %v1772 = vpop.f32.mrf.mxu0
      %v1773 = vadd.f32 0.0, %v1772
      %1774 = vmatmul.f32.gmra.mxu0 %v1735
      %v1775 = vpop.f32.mrf.mxu0
      %v1776 = vadd.f32 0.0, %v1775
      %1777 = vdwg.mxu0
      %1778 = vst.msk [vmem:[%s254] sm:$0xff] %vm392, %v1560
      %1779 = vst.msk [vmem:[%s254 + $0x8] sm:$0xff] %vm392, %v1563
      %1780 = vst.msk [vmem:[%s254 + $0x10] sm:$0xff] %vm392, %v1566
      %1781 = vst.msk [vmem:[%s254 + $0x18] sm:$0xff] %vm392, %v1569
      %1782 = vst.msk [vmem:[%s254 + $0x20] sm:$0xff] %vm392, %v1572
      %1783 = vst.msk [vmem:[%s254 + $0x28] sm:$0xff] %vm392, %v1575
      %1784 = vst.msk [vmem:[%s254 + $0x30] sm:$0xff] %vm392, %v1578
      %1785 = vst.msk [vmem:[%s254 + $0x38] sm:$0xff] %vm392, %v1581
      %1786 = vst.msk [vmem:[%s254 + $0x40] sm:$0xff] %vm392, %v1625
      %1787 = vst.msk [vmem:[%s254 + $0x48] sm:$0xff] %vm392, %v1628
      %1788 = vst.msk [vmem:[%s254 + $0x50] sm:$0xff] %vm392, %v1631
      %1789 = vst.msk [vmem:[%s254 + $0x58] sm:$0xff] %vm392, %v1634
      %1790 = vst.msk [vmem:[%s254 + $0x60] sm:$0xff] %vm392, %v1637
      %1791 = vst.msk [vmem:[%s254 + $0x68] sm:$0xff] %vm392, %v1640
      %1792 = vst.msk [vmem:[%s254 + $0x70] sm:$0xff] %vm392, %v1643
      %1793 = vst.msk [vmem:[%s254 + $0x78] sm:$0xff] %vm392, %v1646
      %1794 = vst.msk [vmem:[%s254 + $0x80] sm:$0xff] %vm392, %v1690
      %1795 = vst.msk [vmem:[%s254 + $0x88] sm:$0xff] %vm392, %v1693
      %1796 = vst.msk [vmem:[%s254 + $0x90] sm:$0xff] %vm392, %v1696
      %1797 = vst.msk [vmem:[%s254 + $0x98] sm:$0xff] %vm392, %v1699
      %1798 = vst.msk [vmem:[%s254 + $0xa0] sm:$0xff] %vm392, %v1702
      %1799 = vst.msk [vmem:[%s254 + $0xa8] sm:$0xff] %vm392, %v1705
      %1800 = vst.msk [vmem:[%s254 + $0xb0] sm:$0xff] %vm392, %v1708
      %1801 = vst.msk [vmem:[%s254 + $0xb8] sm:$0xff] %vm392, %v1711
      %1802 = vst.msk [vmem:[%s254 + $0xc0] sm:$0xff] %vm392, %v1755
      %1803 = vst.msk [vmem:[%s254 + $0xc8] sm:$0xff] %vm392, %v1758
      %1804 = vst.msk [vmem:[%s254 + $0xd0] sm:$0xff] %vm392, %v1761
      %1805 = vst.msk [vmem:[%s254 + $0xd8] sm:$0xff] %vm392, %v1764
      %1806 = vst.msk [vmem:[%s254 + $0xe0] sm:$0xff] %vm392, %v1767
      %1807 = vst.msk [vmem:[%s254 + $0xe8] sm:$0xff] %vm392, %v1770
      %1808 = vst.msk [vmem:[%s254 + $0xf0] sm:$0xff] %vm392, %v1773
      %1809 = vst.msk [vmem:[%s254 + $0xf8] sm:$0xff] %vm392, %v1776
      %s1810 = smul.u32 4, %s15
      %p1811 = scmp.lt.s32.totalorder %s1810, 7
      %s1812 = scalar_select %p1811, %s1810, 7
      %s1813 = smul.addr %s1812, 8
      %s1814 = smul.addr %s1813, 8
      %s1815 = scalar_lea.vmem %s4, %s1814
      // Predicated region
      $region37: #{tpu_custom_call.1} parent=35 // pred_check
        %p1816 = pneg %p132
      $region38: #{tpu_custom_call.1} parent=35 // pred_check_branch
        %1818 = sbr.rel (%p1816) target = $region40
      $region39: #{tpu_custom_call.1} parent=35 // pred_region
        %s1819 = smul.u32 4, %s15
      $region40: #{tpu_custom_call.1} parent=35 // pred_fallthru
        _
    $region36: #{tpu_custom_call.1} parent=5 // pred_fallthru
      _
    %p1820 = scmp.le.s32.totalorder 2, %s10
    // Predicated region
    $region41: #{tpu_custom_call.1} parent=5 // pred_check
      %p1821 = pneg %p1820
    $region42: #{tpu_custom_call.1} parent=5 // pred_check_branch
      %1823 = sbr.rel (%p1821) target = $region44
    $region43: #{tpu_custom_call.1} parent=5 // pred_region
      %s1824 = ssub.s32 %s10, 2
      // Predicated region
      $region45: #{tpu_custom_call.1} parent=43 // pred_check
        %p1825 = pneg %p138
      $region46: #{tpu_custom_call.1} parent=43 // pred_check_branch
        %1827 = sbr.rel (%p1825) target = $region48
      $region47: #{tpu_custom_call.1} parent=43 // pred_region
        %s1828 = smul.u32 4, %s16
        %p1829 = scmp.lt.s32.totalorder %s1828, 7
        %s1830 = scalar_select %p1829, %s1828, 7
        %s1831 = smul.addr %s1830, 8
        %s1832 = smul.addr %s1831, 8
        %s1833 = scalar_lea.vmem %s4, %s1832
      $region48: #{tpu_custom_call.1} parent=43 // pred_fallthru
        _
    $region44: #{tpu_custom_call.1} parent=5 // pred_fallthru
      _
  $region6: #{tpu_custom_call.1} parent=0 // loop_footer
    %s14 = sadd.s32 1, %s10
  $region7: #{tpu_custom_call.1} parent=0 // loop_footer_branch
    %9 = sbr.rel target = $region3
  $region8: #{tpu_custom_call.1} parent=0 // loop_exit
    _

</llo_original>
